<compile_context>
chip_gen: v7x
topology: tpu7x:2x2x1
jax: 0.10.0
libtpu: 0.0.40
codegen_flags: <defaults>
</compile_context>

<pallas_src>
import jax
import jax.numpy as jnp
from jax.experimental import pallas as pl
from jax.experimental.pallas import tpu as pltpu

# ---------------- model dimensions (small synthetic config) ----------------
VOCAB = 20          # number of "words" in the embedding table
SEM_DIM = 32        # semantic (embedding) dimension
FEAT_DIM = 64       # real_features dimension == encoder input == decoder output
NOISE_DIM = 32      # noise_dimension (encoder out, discriminator in)
ENC_HID = 64        # encoder: FEAT_DIM -> ENC_HID -> NOISE_DIM
DEC_HID = 64        # decoder: (SEM_DIM + NOISE_DIM) -> DEC_HID -> FEAT_DIM
DIS_HID = 32        # discriminator: NOISE_DIM -> DIS_HID -> 1

LANES = 128         # everything lives in lane-dense 128-wide tiles

# Input-slab column layout: [ real_features | noise | one_hot(words) | pad ]
COL_FEAT = 0
COL_NOISE = FEAT_DIM                 # 64
COL_WORDS = FEAT_DIM + NOISE_DIM     # 96
# Output-slab column layout: [ reconstruction | fake_dis | true_dis | pad ]
COL_OUT_FAKE = FEAT_DIM              # 64
COL_OUT_TRUE = FEAT_DIM + 1          # 65

assert COL_WORDS + VOCAB <= LANES
assert FEAT_DIM + 2 <= LANES
assert max(SEM_DIM, FEAT_DIM, NOISE_DIM, ENC_HID, DEC_HID, DIS_HID) <= LANES

# Weight-slab block indices (each block is a zero-padded [128,128] tile).
(BLK_EMB, BLK_ENC_W0, BLK_ENC_W1, BLK_DEC_W0A, BLK_DEC_W0N, BLK_DEC_W1,
 BLK_DIS_W0_FAKE, BLK_DIS_W0_TRUE, BLK_DIS_W1_FAKE, BLK_DIS_W1_TRUE) = range(10)
N_WBLOCKS = 10

# Bias-slab row indices (one (8,128) tile total).
(ROW_ENC_B0, ROW_ENC_B1, ROW_DEC_B0, ROW_DEC_B1, ROW_DIS_B0,
 ROW_DIS_B1_FAKE, ROW_DIS_B1_TRUE) = range(7)
N_BIAS_ROWS = 8


# ------------------------------- kernel ------------------------------------
def adv_ae_kernel(x_ref, w_ref, b_ref, out_ref):
    x = x_ref[...]                                          # [tile, 128]

    def dense(h, blk):
        w = w_ref[blk]                                      # resident [128,128]
        return jnp.dot(h.astype(w.dtype), w,
                       preferred_element_type=jnp.float32)

    def bias(row):
        return b_ref[row:row + 1, :].astype(jnp.float32)    # [1, 128]

    def relu(v):
        return jnp.maximum(v, 0.0)

    # Embedding lookup as an MXU matmul: one-hot(words) lanes of x @ emb block.
    attr = dense(x, BLK_EMB)                                # lanes 0:SEM_DIM

    # Encoder MLP: real_features -> pred_noise.
    h_enc = relu(dense(x, BLK_ENC_W0) + bias(ROW_ENC_B0))
    pred_noise = dense(h_enc, BLK_ENC_W1) + bias(ROW_ENC_B1)   # lanes 0:NOISE_DIM

    # Decoder MLP on cat(attributes, pred_noise): split-K matmuls, no lane concat.
    h_dec = relu(dense(attr, BLK_DEC_W0A)
                 + dense(pred_noise, BLK_DEC_W0N)
                 + bias(ROW_DEC_B0))
    recon = dense(h_dec, BLK_DEC_W1) + bias(ROW_DEC_B1)     # lanes 0:FEAT_DIM

    # Discriminator on pred_noise (fake) and on the true-noise lanes of x.
    h_f = relu(dense(pred_noise, BLK_DIS_W0_FAKE) + bias(ROW_DIS_B0))
    h_t = relu(dense(x, BLK_DIS_W0_TRUE) + bias(ROW_DIS_B0))
    fake_d = dense(h_f, BLK_DIS_W1_FAKE) + bias(ROW_DIS_B1_FAKE)   # lane 64 only
    true_d = dense(h_t, BLK_DIS_W1_TRUE) + bias(ROW_DIS_B1_TRUE)   # lane 65 only

    # Zero-padded column placement makes the three results lane-disjoint, so one
    # add packs them into a single lane-dense output tile (one unmasked store).
    out_ref[...] = (recon + fake_d + true_d).astype(out_ref.dtype)


# ------------------------- parameter / input packing -----------------------
def pack_params(params, dtype=jnp.float32):
    """Pack all weights+biases into one [10,128,128] slab + one [8,128] slab."""
    def wblock(w, row0, col0):
        blk = jnp.zeros((LANES, LANES), jnp.float32)
        return blk.at[row0:row0 + w.shape[0], col0:col0 + w.shape[1]].set(w)

    def brow(b, col0):
        row = jnp.zeros((LANES,), jnp.float32)
        return row.at[col0:col0 + b.shape[0]].set(b)

    blocks = [None] * N_WBLOCKS
    blocks[BLK_EMB] = wblock(params["emb"], COL_WORDS, 0)
    blocks[BLK_ENC_W0] = wblock(params["enc_w0"], COL_FEAT, 0)
    blocks[BLK_ENC_W1] = wblock(params["enc_w1"], 0, 0)
    blocks[BLK_DEC_W0A] = wblock(params["dec_w0"][:SEM_DIM], 0, 0)
    blocks[BLK_DEC_W0N] = wblock(params["dec_w0"][SEM_DIM:], 0, 0)
    blocks[BLK_DEC_W1] = wblock(params["dec_w1"], 0, 0)
    blocks[BLK_DIS_W0_FAKE] = wblock(params["dis_w0"], 0, 0)
    blocks[BLK_DIS_W0_TRUE] = wblock(params["dis_w0"], COL_NOISE, 0)
    blocks[BLK_DIS_W1_FAKE] = wblock(params["dis_w1"], 0, COL_OUT_FAKE)
    blocks[BLK_DIS_W1_TRUE] = wblock(params["dis_w1"], 0, COL_OUT_TRUE)

    rows = [jnp.zeros((LANES,), jnp.float32)] * N_BIAS_ROWS
    rows[ROW_ENC_B0] = brow(params["enc_b0"], 0)
    rows[ROW_ENC_B1] = brow(params["enc_b1"], 0)
    rows[ROW_DEC_B0] = brow(params["dec_b0"], 0)
    rows[ROW_DEC_B1] = brow(params["dec_b1"], 0)
    rows[ROW_DIS_B0] = brow(params["dis_b0"], 0)
    rows[ROW_DIS_B1_FAKE] = brow(params["dis_b1"], COL_OUT_FAKE)
    rows[ROW_DIS_B1_TRUE] = brow(params["dis_b1"], COL_OUT_TRUE)

    return jnp.stack(blocks).astype(dtype), jnp.stack(rows).astype(dtype)


def pack_inputs(words, real_features, noise, batch_tile, dtype):
    """One lane-dense input slab [padded_batch, 128] = [feat | noise | onehot]."""
    b = real_features.shape[0]
    onehot = (words[:, None] == jnp.arange(VOCAB, dtype=words.dtype)[None, :])
    x = jnp.concatenate([
        real_features.astype(jnp.float32),
        noise.astype(jnp.float32),
        onehot.astype(jnp.float32),
        jnp.zeros((b, LANES - COL_WORDS - VOCAB), jnp.float32),
    ], axis=-1)
    padded = -(-b // batch_tile) * batch_tile
    x = jnp.pad(x, ((0, padded - b), (0, 0)))
    return x.astype(dtype)


# ------------------------------ forward ------------------------------------
def adv_autoencoder_forward(words, real_features, noise, params, *,
                            compute_dtype=jnp.float32, batch_tile=128):
    """Forward pass of AdvAutoEncoder (words int32[B], real_features f32[B,FEAT],
    noise f32[B,NOISE]).  Returns dict(reconstruction, fake_dis, true_dis)."""
    b = real_features.shape[0]
    # In real training these two slabs would be packed once and cached.
    w_slab, b_slab = pack_params(params, compute_dtype)
    x = pack_inputs(words, real_features, noise, batch_tile, compute_dtype)
    padded_b = x.shape[0]
    grid = (padded_b // batch_tile,)

    out = pl.pallas_call(
        adv_ae_kernel,
        out_shape=jax.ShapeDtypeStruct((padded_b, LANES), jnp.float32),
        grid_spec=pltpu.PrefetchScalarGridSpec(
            num_scalar_prefetch=0,
            grid=grid,
            in_specs=[
                pl.BlockSpec((batch_tile, LANES), lambda i: (i, 0)),
                # Constant index_map: parameter slabs DMA'd once, stay resident.
                pl.BlockSpec((N_WBLOCKS, LANES, LANES), lambda i: (0, 0, 0)),
                pl.BlockSpec((N_BIAS_ROWS, LANES), lambda i: (0, 0)),
            ],
            out_specs=pl.BlockSpec((batch_tile, LANES), lambda i: (i, 0)),
        ),
        compiler_params=pltpu.CompilerParams(
            # Batch axis is embarrassingly parallel -> sharded across both
            # TensorCores on v7x; harmless elsewhere.
            dimension_semantics=("parallel",),
        ),
    )(x, w_slab, b_slab)

    return {
        "reconstruction": out[:b, :FEAT_DIM],
        "fake_dis": out[:b, COL_OUT_FAKE:COL_OUT_FAKE + 1],
        "true_dis": out[:b, COL_OUT_TRUE:COL_OUT_TRUE + 1],
    }


# ------------------------- params / reference ------------------------------
def init_params(key):
    ks = jax.random.split(key, 13)
    scale = 0.1

    def w(k, shape):
        return (scale * jax.random.normal(k, shape)).astype(jnp.float32)

    return {
        "emb":    w(ks[0], (VOCAB, SEM_DIM)),
        "enc_w0": w(ks[1], (FEAT_DIM, ENC_HID)),
        "enc_b0": w(ks[2], (ENC_HID,)),
        "enc_w1": w(ks[3], (ENC_HID, NOISE_DIM)),
        "enc_b1": w(ks[4], (NOISE_DIM,)),
        "dec_w0": w(ks[5], (SEM_DIM + NOISE_DIM, DEC_HID)),
        "dec_b0": w(ks[6], (DEC_HID,)),
        "dec_w1": w(ks[7], (DEC_HID, FEAT_DIM)),
        "dec_b1": w(ks[8], (FEAT_DIM,)),
        "dis_w0": w(ks[9], (NOISE_DIM, DIS_HID)),
        "dis_b0": w(ks[10], (DIS_HID,)),
        "dis_w1": w(ks[11], (DIS_HID, 1)),
        "dis_b1": w(ks[12], (1,)),
    }


def _reference_forward(words, real_features, noise, params):
    """Pure-JAX reference (full f32 precision) for correctness checking."""
    hp = jax.lax.Precision.HIGHEST
    attr = jnp.take(params["emb"], words, axis=0)
    h = jnp.maximum(jnp.dot(real_features, params["enc_w0"], precision=hp)
                    + params["enc_b0"], 0.0)
    pred_noise = jnp.dot(h, params["enc_w1"], precision=hp) + params["enc_b1"]
    z = jnp.concatenate([attr, pred_noise], axis=-1)
    h = jnp.maximum(jnp.dot(z, params["dec_w0"], precision=hp)
                    + params["dec_b0"], 0.0)
    recon = jnp.dot(h, params["dec_w1"], precision=hp) + params["dec_b1"]

    def dis(v):
        hh = jnp.maximum(jnp.dot(v, params["dis_w0"], precision=hp)
                         + params["dis_b0"], 0.0)
        return jnp.dot(hh, params["dis_w1"], precision=hp) + params["dis_b1"]

    return {"reconstruction": recon,
            "fake_dis": dis(pred_noise),
            "true_dis": dis(noise)}


# --------------------------------- main -------------------------------------
if __name__ == "__main__":
    key = jax.random.PRNGKey(0)
    k_params = jax.random.fold_in(key, 0)
    params = init_params(k_params)

    checks = [
        # (batch, compute_dtype, atol, rtol)
        (8,   jnp.float32,  1e-4, 1e-4),   # exact f32 path, single batch tile
        (200, jnp.bfloat16, 5e-2, 5e-2),   # bf16 fast path (v6e/v7x MXU), grid=2
    ]
    for batch, dtype, atol, rtol in checks:
        kw, kf, kn = jax.random.split(jax.random.fold_in(key, batch), 3)
        words = jax.random.randint(kw, (batch,), 0, VOCAB, dtype=jnp.int32)
        real_features = jax.random.normal(kf, (batch, FEAT_DIM), dtype=jnp.float32)
        # get_noise(): noise_type == 'normal' -> standard normal draw
        noise = jax.random.normal(kn, (batch, NOISE_DIM), dtype=jnp.float32)

        outs = adv_autoencoder_forward(words, real_features, noise, params,
                                       compute_dtype=dtype)
        outs = jax.tree_util.tree_map(jax.block_until_ready, outs)
        ref = _reference_forward(words, real_features, noise, params)

        for name in ("reconstruction", "fake_dis", "true_dis"):
            assert outs[name].shape == ref[name].shape, (name, outs[name].shape)
            assert jnp.allclose(outs[name], ref[name], atol=atol, rtol=rtol), \
                (name, dtype)

    print("KERNEL_OK")
</pallas_src>

<mosaic_0001>
module attributes {stable_mosaic.version = 11 : i64} {
  func.func @adv_ae_kernel(%arg0: i32, %arg1: memref<128x128xf32, #tpu.memory_space<vmem>>, %arg2: memref<10x128x128xf32, #tpu.memory_space<vmem>>, %arg3: memref<8x128xf32, #tpu.memory_space<vmem>>, %arg4: memref<128x128xf32, #tpu.memory_space<vmem>>) attributes {dimension_semantics = [#tpu.dimension_semantics<parallel>], iteration_bounds = array<i64: 1>, scalar_prefetch = 0 : i64, scratch_operands = 0 : i64, tpu.core_type = #tpu.core_type<tc>, window_params = [{transform_indices = @transform_0, window_bounds = array<i64: 128, 128>}, {pipeline_mode = #tpu.pipeline_mode<synchronous>, transform_indices = @transform_1, window_bounds = array<i64: 10, 128, 128>}, {pipeline_mode = #tpu.pipeline_mode<synchronous>, transform_indices = @transform_2, window_bounds = array<i64: 8, 128>}, {transform_indices = @transform_3, window_bounds = array<i64: 128, 128>}]} {
    %c0 = arith.constant 0 : index
    %c0_0 = arith.constant 0 : index
    %0 = vector.load %arg1[%c0, %c0_0] : memref<128x128xf32, #tpu.memory_space<vmem>>, vector<128x128xf32>
    %c0_1 = arith.constant 0 : index
    %c0_2 = arith.constant 0 : index
    %c0_3 = arith.constant 0 : index
    %1 = vector.load %arg2[%c0_1, %c0_2, %c0_3] : memref<10x128x128xf32, #tpu.memory_space<vmem>>, vector<1x128x128xf32>
    %2 = vector.shape_cast %1 : vector<1x128x128xf32> to vector<128x128xf32>
    %cst = arith.constant dense<0.000000e+00> : vector<128x128xf32>
    %3 = tpu.matmul %0, %2, %cst {dimension_numbers = #tpu.dot_dimension_numbers<[1], [0], [0], [1], [0, 0, 1, 1], [], []>} : vector<128x128xf32>, vector<128x128xf32>, vector<128x128xf32> -> vector<128x128xf32>
    %c1 = arith.constant 1 : index
    %c0_4 = arith.constant 0 : index
    %c0_5 = arith.constant 0 : index
    %4 = vector.load %arg2[%c1, %c0_4, %c0_5] : memref<10x128x128xf32, #tpu.memory_space<vmem>>, vector<1x128x128xf32>
    %5 = vector.shape_cast %4 : vector<1x128x128xf32> to vector<128x128xf32>
    %cst_6 = arith.constant dense<0.000000e+00> : vector<128x128xf32>
    %6 = tpu.matmul %0, %5, %cst_6 {dimension_numbers = #tpu.dot_dimension_numbers<[1], [0], [0], [1], [0, 0, 1, 1], [], []>} : vector<128x128xf32>, vector<128x128xf32>, vector<128x128xf32> -> vector<128x128xf32>
    %c0_7 = arith.constant 0 : index
    %c0_8 = arith.constant 0 : index
    %7 = vector.load %arg3[%c0_7, %c0_8] : memref<8x128xf32, #tpu.memory_space<vmem>>, vector<1x128xf32>
    %8 = vector.broadcast %7 : vector<1x128xf32> to vector<128x128xf32>
    %9 = arith.addf %6, %8 : vector<128x128xf32>
    %cst_9 = arith.constant 0.000000e+00 : f32
    %10 = vector.broadcast %cst_9 : f32 to vector<128x128xf32>
    %11 = arith.maximumf %9, %10 : vector<128x128xf32>
    %c2 = arith.constant 2 : index
    %c0_10 = arith.constant 0 : index
    %c0_11 = arith.constant 0 : index
    %12 = vector.load %arg2[%c2, %c0_10, %c0_11] : memref<10x128x128xf32, #tpu.memory_space<vmem>>, vector<1x128x128xf32>
    %13 = vector.shape_cast %12 : vector<1x128x128xf32> to vector<128x128xf32>
    %cst_12 = arith.constant dense<0.000000e+00> : vector<128x128xf32>
    %14 = tpu.matmul %11, %13, %cst_12 {dimension_numbers = #tpu.dot_dimension_numbers<[1], [0], [0], [1], [0, 0, 1, 1], [], []>} : vector<128x128xf32>, vector<128x128xf32>, vector<128x128xf32> -> vector<128x128xf32>
    %c1_13 = arith.constant 1 : index
    %c0_14 = arith.constant 0 : index
    %15 = vector.load %arg3[%c1_13, %c0_14] : memref<8x128xf32, #tpu.memory_space<vmem>>, vector<1x128xf32>
    %16 = vector.broadcast %15 : vector<1x128xf32> to vector<128x128xf32>
    %17 = arith.addf %14, %16 : vector<128x128xf32>
    %c3 = arith.constant 3 : index
    %c0_15 = arith.constant 0 : index
    %c0_16 = arith.constant 0 : index
    %18 = vector.load %arg2[%c3, %c0_15, %c0_16] : memref<10x128x128xf32, #tpu.memory_space<vmem>>, vector<1x128x128xf32>
    %19 = vector.shape_cast %18 : vector<1x128x128xf32> to vector<128x128xf32>
    %cst_17 = arith.constant dense<0.000000e+00> : vector<128x128xf32>
    %20 = tpu.matmul %3, %19, %cst_17 {dimension_numbers = #tpu.dot_dimension_numbers<[1], [0], [0], [1], [0, 0, 1, 1], [], []>} : vector<128x128xf32>, vector<128x128xf32>, vector<128x128xf32> -> vector<128x128xf32>
    %c4 = arith.constant 4 : index
    %c0_18 = arith.constant 0 : index
    %c0_19 = arith.constant 0 : index
    %21 = vector.load %arg2[%c4, %c0_18, %c0_19] : memref<10x128x128xf32, #tpu.memory_space<vmem>>, vector<1x128x128xf32>
    %22 = vector.shape_cast %21 : vector<1x128x128xf32> to vector<128x128xf32>
    %cst_20 = arith.constant dense<0.000000e+00> : vector<128x128xf32>
    %23 = tpu.matmul %17, %22, %cst_20 {dimension_numbers = #tpu.dot_dimension_numbers<[1], [0], [0], [1], [0, 0, 1, 1], [], []>} : vector<128x128xf32>, vector<128x128xf32>, vector<128x128xf32> -> vector<128x128xf32>
    %24 = arith.addf %20, %23 : vector<128x128xf32>
    %c2_21 = arith.constant 2 : index
    %c0_22 = arith.constant 0 : index
    %25 = vector.load %arg3[%c2_21, %c0_22] : memref<8x128xf32, #tpu.memory_space<vmem>>, vector<1x128xf32>
    %26 = vector.broadcast %25 : vector<1x128xf32> to vector<128x128xf32>
    %27 = arith.addf %24, %26 : vector<128x128xf32>
    %cst_23 = arith.constant 0.000000e+00 : f32
    %28 = vector.broadcast %cst_23 : f32 to vector<128x128xf32>
    %29 = arith.maximumf %27, %28 : vector<128x128xf32>
    %c5 = arith.constant 5 : index
    %c0_24 = arith.constant 0 : index
    %c0_25 = arith.constant 0 : index
    %30 = vector.load %arg2[%c5, %c0_24, %c0_25] : memref<10x128x128xf32, #tpu.memory_space<vmem>>, vector<1x128x128xf32>
    %31 = vector.shape_cast %30 : vector<1x128x128xf32> to vector<128x128xf32>
    %cst_26 = arith.constant dense<0.000000e+00> : vector<128x128xf32>
    %32 = tpu.matmul %29, %31, %cst_26 {dimension_numbers = #tpu.dot_dimension_numbers<[1], [0], [0], [1], [0, 0, 1, 1], [], []>} : vector<128x128xf32>, vector<128x128xf32>, vector<128x128xf32> -> vector<128x128xf32>
    %c3_27 = arith.constant 3 : index
    %c0_28 = arith.constant 0 : index
    %33 = vector.load %arg3[%c3_27, %c0_28] : memref<8x128xf32, #tpu.memory_space<vmem>>, vector<1x128xf32>
    %34 = vector.broadcast %33 : vector<1x128xf32> to vector<128x128xf32>
    %35 = arith.addf %32, %34 : vector<128x128xf32>
    %c6 = arith.constant 6 : index
    %c0_29 = arith.constant 0 : index
    %c0_30 = arith.constant 0 : index
    %36 = vector.load %arg2[%c6, %c0_29, %c0_30] : memref<10x128x128xf32, #tpu.memory_space<vmem>>, vector<1x128x128xf32>
    %37 = vector.shape_cast %36 : vector<1x128x128xf32> to vector<128x128xf32>
    %cst_31 = arith.constant dense<0.000000e+00> : vector<128x128xf32>
    %38 = tpu.matmul %17, %37, %cst_31 {dimension_numbers = #tpu.dot_dimension_numbers<[1], [0], [0], [1], [0, 0, 1, 1], [], []>} : vector<128x128xf32>, vector<128x128xf32>, vector<128x128xf32> -> vector<128x128xf32>
    %c4_32 = arith.constant 4 : index
    %c0_33 = arith.constant 0 : index
    %39 = vector.load %arg3[%c4_32, %c0_33] : memref<8x128xf32, #tpu.memory_space<vmem>>, vector<1x128xf32>
    %40 = vector.broadcast %39 : vector<1x128xf32> to vector<128x128xf32>
    %41 = arith.addf %38, %40 : vector<128x128xf32>
    %cst_34 = arith.constant 0.000000e+00 : f32
    %42 = vector.broadcast %cst_34 : f32 to vector<128x128xf32>
    %43 = arith.maximumf %41, %42 : vector<128x128xf32>
    %c7 = arith.constant 7 : index
    %c0_35 = arith.constant 0 : index
    %c0_36 = arith.constant 0 : index
    %44 = vector.load %arg2[%c7, %c0_35, %c0_36] : memref<10x128x128xf32, #tpu.memory_space<vmem>>, vector<1x128x128xf32>
    %45 = vector.shape_cast %44 : vector<1x128x128xf32> to vector<128x128xf32>
    %cst_37 = arith.constant dense<0.000000e+00> : vector<128x128xf32>
    %46 = tpu.matmul %0, %45, %cst_37 {dimension_numbers = #tpu.dot_dimension_numbers<[1], [0], [0], [1], [0, 0, 1, 1], [], []>} : vector<128x128xf32>, vector<128x128xf32>, vector<128x128xf32> -> vector<128x128xf32>
    %c4_38 = arith.constant 4 : index
    %c0_39 = arith.constant 0 : index
    %47 = vector.load %arg3[%c4_38, %c0_39] : memref<8x128xf32, #tpu.memory_space<vmem>>, vector<1x128xf32>
    %48 = vector.broadcast %47 : vector<1x128xf32> to vector<128x128xf32>
    %49 = arith.addf %46, %48 : vector<128x128xf32>
    %cst_40 = arith.constant 0.000000e+00 : f32
    %50 = vector.broadcast %cst_40 : f32 to vector<128x128xf32>
    %51 = arith.maximumf %49, %50 : vector<128x128xf32>
    %c8 = arith.constant 8 : index
    %c0_41 = arith.constant 0 : index
    %c0_42 = arith.constant 0 : index
    %52 = vector.load %arg2[%c8, %c0_41, %c0_42] : memref<10x128x128xf32, #tpu.memory_space<vmem>>, vector<1x128x128xf32>
    %53 = vector.shape_cast %52 : vector<1x128x128xf32> to vector<128x128xf32>
    %cst_43 = arith.constant dense<0.000000e+00> : vector<128x128xf32>
    %54 = tpu.matmul %43, %53, %cst_43 {dimension_numbers = #tpu.dot_dimension_numbers<[1], [0], [0], [1], [0, 0, 1, 1], [], []>} : vector<128x128xf32>, vector<128x128xf32>, vector<128x128xf32> -> vector<128x128xf32>
    %c5_44 = arith.constant 5 : index
    %c0_45 = arith.constant 0 : index
    %55 = vector.load %arg3[%c5_44, %c0_45] : memref<8x128xf32, #tpu.memory_space<vmem>>, vector<1x128xf32>
    %56 = vector.broadcast %55 : vector<1x128xf32> to vector<128x128xf32>
    %57 = arith.addf %54, %56 : vector<128x128xf32>
    %c9 = arith.constant 9 : index
    %c0_46 = arith.constant 0 : index
    %c0_47 = arith.constant 0 : index
    %58 = vector.load %arg2[%c9, %c0_46, %c0_47] : memref<10x128x128xf32, #tpu.memory_space<vmem>>, vector<1x128x128xf32>
    %59 = vector.shape_cast %58 : vector<1x128x128xf32> to vector<128x128xf32>
    %cst_48 = arith.constant dense<0.000000e+00> : vector<128x128xf32>
    %60 = tpu.matmul %51, %59, %cst_48 {dimension_numbers = #tpu.dot_dimension_numbers<[1], [0], [0], [1], [0, 0, 1, 1], [], []>} : vector<128x128xf32>, vector<128x128xf32>, vector<128x128xf32> -> vector<128x128xf32>
    %c6_49 = arith.constant 6 : index
    %c0_50 = arith.constant 0 : index
    %61 = vector.load %arg3[%c6_49, %c0_50] : memref<8x128xf32, #tpu.memory_space<vmem>>, vector<1x128xf32>
    %62 = vector.broadcast %61 : vector<1x128xf32> to vector<128x128xf32>
    %63 = arith.addf %60, %62 : vector<128x128xf32>
    %64 = arith.addf %35, %57 : vector<128x128xf32>
    %65 = arith.addf %64, %63 : vector<128x128xf32>
    %c0_51 = arith.constant 0 : index
    %c0_52 = arith.constant 0 : index
    %66 = vector.load %arg4[%c0_51, %c0_52] : memref<128x128xf32, #tpu.memory_space<vmem>>, vector<128x128xf32>
    tpu.vector_store %arg4[%c0_51, %c0_52], %65 {strides = array<i32>} : memref<128x128xf32, #tpu.memory_space<vmem>>, vector<128x128xf32>,
    return
  }
  func.func @transform_0(%arg0: i32) -> (i32, i32) {
    %c0_i32 = arith.constant 0 : i32
    %c0_i32_0 = arith.constant 0 : i32
    return %arg0, %c0_i32 : i32, i32
  }
  func.func @transform_1(%arg0: i32) -> (i32, i32, i32) {
    %c0_i32 = arith.constant 0 : i32
    %c0_i32_0 = arith.constant 0 : i32
    %c0_i32_1 = arith.constant 0 : i32
    %c0_i32_2 = arith.constant 0 : i32
    return %c0_i32, %c0_i32_0, %c0_i32_1 : i32, i32, i32
  }
  func.func @transform_2(%arg0: i32) -> (i32, i32) {
    %c0_i32 = arith.constant 0 : i32
    %c0_i32_0 = arith.constant 0 : i32
    %c0_i32_1 = arith.constant 0 : i32
    return %c0_i32, %c0_i32_0 : i32, i32
  }
  func.func @transform_3(%arg0: i32) -> (i32, i32) {
    %c0_i32 = arith.constant 0 : i32
    %c0_i32_0 = arith.constant 0 : i32
    return %arg0, %c0_i32 : i32, i32
  }
}

</mosaic_0001>

<llo_original>
// kernel: tpu_custom_call.1
$region0: #{tpu_custom_call.1}
  #allocation0 [shape = 'u32[]', space=smem, size = 0x4, offset = 0x4, fixed_abs, tag = 'smem constant byte address 0x4 - core index']
  #allocation1 [shape = 'u32[144,128]{1,0:T(1,128)}', space=vmem, size = 0x12000, scoped, tag = 'internal scratch']
  %s0 = inlined_call_operand.hbm [shape: f32[128,128], index: 0, kind: input, shape index: {}]
  %s1 = inlined_call_operand.hbm [shape: f32[10,128,128], index: 1, kind: input, shape index: {}]
  %s2 = inlined_call_operand.hbm [shape: f32[8,128], index: 2, kind: input, shape index: {}]
  %s3 = inlined_call_operand.hbm [shape: f32[128,128], index: 3, kind: output, shape index: {}]
  %s4 = sld [smem:[#allocation0]]
  $region34: #{tpu_custom_call.1} parent=0
    _
  %s6 = ssub.s32 1, %s4
  %s7 = scalar_select 0, %s6, %s4
  $region1: #{tpu_custom_call.1} parent=0
    #allocation2 [shape = 'u8[65536]{0}', space=vmem, size = 0x10000, scoped, tag = 'input window, operand 0, single buffered']
    #allocation3 [shape = 's32[1]{0}', space=sflag, size = 0x4, scoped, tag = 'scoped memory for tpu_custom_call.1']
    #allocation4 [shape = 's32[1]{0}', space=sflag, size = 0x4, scoped, tag = 'scoped memory for tpu_custom_call.1']
    #allocation5 [shape = 'u8[655360]{0}', space=vmem, size = 0xa0000, scoped, tag = 'input window, operand 1, single buffered']
    #allocation6 [shape = 's32[1]{0}', space=sflag, size = 0x4, scoped, tag = 'scoped memory for tpu_custom_call.1']
    #allocation7 [shape = 'u8[4096]{0}', space=vmem, size = 0x1000, scoped, tag = 'input window, operand 2, single buffered']
    #allocation8 [shape = 'u8[65536]{0}', space=vmem, size = 0x10000, scoped, tag = 'output window, operand 0, single buffered']
    %8 = vsyncpa [#allocation3], 0
    %9 = vsyncpa [#allocation6], 0
    %10 = vsyncpa [#allocation4], 0
    // Predicated region
    $region2: #{tpu_custom_call.1} parent=1 // pred_check
      _
    $region3: #{tpu_custom_call.1} parent=1 // pred_check_branch
      %12 = sbr.rel (0) target = $region5
    $region4: #{tpu_custom_call.1} parent=1 // pred_region
      %s14 = ssub.s32 2048, 2048
      %15 = vsyncadd [#allocation3], %s14
      %s16 = sshll.u32 [#allocation2], 4
      %s17 = int_to_ptr.vmem [resolvable:$true] %s16
      %22 = dma.hbm_to_vmem [thread:$0]  %s0, 2048, %s17, [#allocation3], 128, 128, 8
    $region5: #{tpu_custom_call.1} parent=1 // pred_fallthru
      _
    // Predicated region
    $region6: #{tpu_custom_call.1} parent=1 // pred_check
      _
    $region7: #{tpu_custom_call.1} parent=1 // pred_check_branch
      %24 = sbr.rel (0) target = $region9
    $region8: #{tpu_custom_call.1} parent=1 // pred_region
      %s26 = ssub.s32 20480, 20480
      %27 = vsyncadd [#allocation6], %s26
      %s28 = sshll.u32 [#allocation5], 4
      %s29 = int_to_ptr.vmem [resolvable:$true] %s28
      %34 = dma.hbm_to_vmem [thread:$0]  %s1, 20480, %s29, [#allocation6], 128, 128, 8
    $region9: #{tpu_custom_call.1} parent=1 // pred_fallthru
      _
    // Predicated region
    $region10: #{tpu_custom_call.1} parent=1 // pred_check
      _
    $region11: #{tpu_custom_call.1} parent=1 // pred_check_branch
      %36 = sbr.rel (0) target = $region13
    $region12: #{tpu_custom_call.1} parent=1 // pred_region
      %s38 = ssub.s32 128, 128
      %39 = vsyncadd [#allocation6], %s38
      %s41 = sshll.u32 [#allocation7], 4
      %s42 = int_to_ptr.vmem [resolvable:$true] %s41
      %44 = dma.hbm_to_vmem [thread:$0]  %s2, 128, %s42, [#allocation6]
    $region13: #{tpu_custom_call.1} parent=1 // pred_fallthru
      _
    // Predicated region
    $region14: #{tpu_custom_call.1} parent=1 // pred_check
      _
    $region15: #{tpu_custom_call.1} parent=1 // pred_check_branch
      %46 = sbr.rel (0) target = $region17
    $region16: #{tpu_custom_call.1} parent=1 // pred_region
      %47 = dma.done [#allocation3], 2048
    $region17: #{tpu_custom_call.1} parent=1 // pred_fallthru
      _
    // Predicated region
    $region18: #{tpu_custom_call.1} parent=1 // pred_check
      _
    $region19: #{tpu_custom_call.1} parent=1 // pred_check_branch
      %49 = sbr.rel (0) target = $region21
    $region20: #{tpu_custom_call.1} parent=1 // pred_region
      %50 = dma.done [#allocation6], 20480
    $region21: #{tpu_custom_call.1} parent=1 // pred_fallthru
      _
    // Predicated region
    $region22: #{tpu_custom_call.1} parent=1 // pred_check
      _
    $region23: #{tpu_custom_call.1} parent=1 // pred_check_branch
      %52 = sbr.rel (0) target = $region25
    $region24: #{tpu_custom_call.1} parent=1 // pred_region
      %53 = dma.done [#allocation6], 128
    $region25: #{tpu_custom_call.1} parent=1 // pred_fallthru
      _
    %v54 = vld [vmem:[#allocation2] sm:$0xff]
    %v55 = vld [vmem:[#allocation2 + $0x8] sm:$0xff]
    %v56 = vld [vmem:[#allocation2 + $0x10] sm:$0xff]
    %v57 = vld [vmem:[#allocation2 + $0x18] sm:$0xff]
    %v58 = vld [vmem:[#allocation2 + $0x20] sm:$0xff]
    %v59 = vld [vmem:[#allocation2 + $0x28] sm:$0xff]
    %v60 = vld [vmem:[#allocation2 + $0x30] sm:$0xff]
    %v61 = vld [vmem:[#allocation2 + $0x38] sm:$0xff]
    %v62 = vld [vmem:[#allocation2 + $0x40] sm:$0xff]
    %v63 = vld [vmem:[#allocation2 + $0x48] sm:$0xff]
    %v64 = vld [vmem:[#allocation2 + $0x50] sm:$0xff]
    %v65 = vld [vmem:[#allocation2 + $0x58] sm:$0xff]
    %v66 = vld [vmem:[#allocation2 + $0x60] sm:$0xff]
    %v67 = vld [vmem:[#allocation2 + $0x68] sm:$0xff]
    %v68 = vld [vmem:[#allocation2 + $0x70] sm:$0xff]
    %v69 = vld [vmem:[#allocation2 + $0x78] sm:$0xff]
    %v70 = vld [vmem:[#allocation5] sm:$0xff]
    %v71 = vld [vmem:[#allocation5 + $0x8] sm:$0xff]
    %v72 = vld [vmem:[#allocation5 + $0x10] sm:$0xff]
    %v73 = vld [vmem:[#allocation5 + $0x18] sm:$0xff]
    %v74 = vld [vmem:[#allocation5 + $0x20] sm:$0xff]
    %v75 = vld [vmem:[#allocation5 + $0x28] sm:$0xff]
    %v76 = vld [vmem:[#allocation5 + $0x30] sm:$0xff]
    %v77 = vld [vmem:[#allocation5 + $0x38] sm:$0xff]
    %v78 = vld [vmem:[#allocation5 + $0x40] sm:$0xff]
    %v79 = vld [vmem:[#allocation5 + $0x48] sm:$0xff]
    %v80 = vld [vmem:[#allocation5 + $0x50] sm:$0xff]
    %v81 = vld [vmem:[#allocation5 + $0x58] sm:$0xff]
    %v82 = vld [vmem:[#allocation5 + $0x60] sm:$0xff]
    %v83 = vld [vmem:[#allocation5 + $0x68] sm:$0xff]
    %v84 = vld [vmem:[#allocation5 + $0x70] sm:$0xff]
    %v85 = vld [vmem:[#allocation5 + $0x78] sm:$0xff]
    %86 = vmatprep.subr.mxu0 0.0
    %87 = vmatpush1.msra.mxu0 %v70
    %88 = vmatprep.subr.mxu0 0.0
    %89 = vmatpush1.msra.mxu0 %v71
    %90 = vmatprep.subr.mxu0 0.0
    %91 = vmatpush1.msra.mxu0 %v72
    %92 = vmatprep.subr.mxu0 0.0
    %93 = vmatpush1.msra.mxu0 %v73
    %94 = vmatprep.subr.mxu0 0.0
    %95 = vmatpush1.msra.mxu0 %v74
    %96 = vmatprep.subr.mxu0 0.0
    %97 = vmatpush1.msra.mxu0 %v75
    %98 = vmatprep.subr.mxu0 0.0
    %99 = vmatpush1.msra.mxu0 %v76
    %100 = vmatprep.subr.mxu0 0.0
    %101 = vmatpush1.msra.mxu0 %v77
    %102 = vmatprep.subr.mxu0 0.0
    %103 = vmatpush1.msra.mxu0 %v78
    %104 = vmatprep.subr.mxu0 0.0
    %105 = vmatpush1.msra.mxu0 %v79
    %106 = vmatprep.subr.mxu0 0.0
    %107 = vmatpush1.msra.mxu0 %v80
    %108 = vmatprep.subr.mxu0 0.0
    %109 = vmatpush1.msra.mxu0 %v81
    %110 = vmatprep.subr.mxu0 0.0
    %111 = vmatpush1.msra.mxu0 %v82
    %112 = vmatprep.subr.mxu0 0.0
    %113 = vmatpush1.msra.mxu0 %v83
    %114 = vmatprep.subr.mxu0 0.0
    %115 = vmatpush1.msra.mxu0 %v84
    %116 = vmatprep.subr.mxu0 0.0
    %117 = vmatpush1.msra.mxu0 %v85
    %118 = vmatprep.subr.mxu0 0.0
    %119 = vmatpush1.msra.mxu0 0.0
    %120 = vmatprep.subr.mxu0 0.0
    %121 = vmatpush1.msra.mxu0 0.0
    %122 = vmatprep.subr.mxu0 0.0
    %123 = vmatpush1.msra.mxu0 0.0
    %124 = vmatprep.subr.mxu0 0.0
    %125 = vmatpush1.msra.mxu0 0.0
    %126 = vmatprep.subr.mxu0 0.0
    %127 = vmatpush1.msra.mxu0 0.0
    %128 = vmatprep.subr.mxu0 0.0
    %129 = vmatpush1.msra.mxu0 0.0
    %130 = vmatprep.subr.mxu0 0.0
    %131 = vmatpush1.msra.mxu0 0.0
    %132 = vmatprep.subr.mxu0 0.0
    %133 = vmatpush1.msra.mxu0 0.0
    %134 = vmatprep.subr.mxu0 0.0
    %135 = vmatpush1.msra.mxu0 0.0
    %136 = vmatprep.subr.mxu0 0.0
    %137 = vmatpush1.msra.mxu0 0.0
    %138 = vmatprep.subr.mxu0 0.0
    %139 = vmatpush1.msra.mxu0 0.0
    %140 = vmatprep.subr.mxu0 0.0
    %141 = vmatpush1.msra.mxu0 0.0
    %142 = vmatprep.subr.mxu0 0.0
    %143 = vmatpush1.msra.mxu0 0.0
    %144 = vmatprep.subr.mxu0 0.0
    %145 = vmatpush1.msra.mxu0 0.0
    %146 = vmatprep.subr.mxu0 0.0
    %147 = vmatpush1.msra.mxu0 0.0
    %148 = vmatprep.subr.mxu0 0.0
    %149 = vmatpush1.msra.mxu0 0.0
    %150 = vmatprep.mubr.f32.mxu0 0.0
    %151 = vmatmul.mubr.f32.gmra.mrb[0].mxu0 %v54
    %v152 = vpop.f32.mrb[0].mxu0
    %v153 = vadd.f32 0.0, %v152
    %v154 = vpop.f32.mrb[0].mxu0
    %155 = vmatprep.mubr.f32.mxu0 0.0
    %156 = vmatmul.mubr.f32.gmra.mrb[0].mxu0 %v55
    %v157 = vpop.f32.mrb[0].mxu0
    %v158 = vadd.f32 0.0, %v157
    %v159 = vpop.f32.mrb[0].mxu0
    %160 = vmatprep.mubr.f32.mxu0 0.0
    %161 = vmatmul.mubr.f32.gmra.mrb[0].mxu0 %v56
    %v162 = vpop.f32.mrb[0].mxu0
    %v163 = vadd.f32 0.0, %v162
    %v164 = vpop.f32.mrb[0].mxu0
    %165 = vmatprep.mubr.f32.mxu0 0.0
    %166 = vmatmul.mubr.f32.gmra.mrb[0].mxu0 %v57
    %v167 = vpop.f32.mrb[0].mxu0
    %v168 = vadd.f32 0.0, %v167
    %v169 = vpop.f32.mrb[0].mxu0
    %170 = vmatprep.mubr.f32.mxu0 0.0
    %171 = vmatmul.mubr.f32.gmra.mrb[0].mxu0 %v58
    %v172 = vpop.f32.mrb[0].mxu0
    %v173 = vadd.f32 0.0, %v172
    %v174 = vpop.f32.mrb[0].mxu0
    %175 = vmatprep.mubr.f32.mxu0 0.0
    %176 = vmatmul.mubr.f32.gmra.mrb[0].mxu0 %v59
    %v177 = vpop.f32.mrb[0].mxu0
    %v178 = vadd.f32 0.0, %v177
    %v179 = vpop.f32.mrb[0].mxu0
    %180 = vmatprep.mubr.f32.mxu0 0.0
    %181 = vmatmul.mubr.f32.gmra.mrb[0].mxu0 %v60
    %v182 = vpop.f32.mrb[0].mxu0
    %v183 = vadd.f32 0.0, %v182
    %v184 = vpop.f32.mrb[0].mxu0
    %185 = vmatprep.mubr.f32.mxu0 0.0
    %186 = vmatmul.mubr.f32.gmra.mrb[0].mxu0 %v61
    %v187 = vpop.f32.mrb[0].mxu0
    %v188 = vadd.f32 0.0, %v187
    %v189 = vpop.f32.mrb[0].mxu0
    %190 = vmatprep.mubr.f32.mxu0 0.0
    %191 = vmatmul.mubr.f32.gmra.mrb[0].mxu0 %v62
    %v192 = vpop.f32.mrb[0].mxu0
    %v193 = vadd.f32 0.0, %v192
    %v194 = vpop.f32.mrb[0].mxu0
    %195 = vmatprep.mubr.f32.mxu0 0.0
    %196 = vmatmul.mubr.f32.gmra.mrb[0].mxu0 %v63
    %v197 = vpop.f32.mrb[0].mxu0
    %v198 = vadd.f32 0.0, %v197
    %v199 = vpop.f32.mrb[0].mxu0
    %200 = vmatprep.mubr.f32.mxu0 0.0
    %201 = vmatmul.mubr.f32.gmra.mrb[0].mxu0 %v64
    %v202 = vpop.f32.mrb[0].mxu0
    %v203 = vadd.f32 0.0, %v202
    %v204 = vpop.f32.mrb[0].mxu0
    %205 = vmatprep.mubr.f32.mxu0 0.0
    %206 = vmatmul.mubr.f32.gmra.mrb[0].mxu0 %v65
    %v207 = vpop.f32.mrb[0].mxu0
    %v208 = vadd.f32 0.0, %v207
    %v209 = vpop.f32.mrb[0].mxu0
    %210 = vmatprep.mubr.f32.mxu0 0.0
    %211 = vmatmul.mubr.f32.gmra.mrb[0].mxu0 %v66
    %v212 = vpop.f32.mrb[0].mxu0
    %v213 = vadd.f32 0.0, %v212
    %v214 = vpop.f32.mrb[0].mxu0
    %215 = vmatprep.mubr.f32.mxu0 0.0
    %216 = vmatmul.mubr.f32.gmra.mrb[0].mxu0 %v67
    %v217 = vpop.f32.mrb[0].mxu0
    %v218 = vadd.f32 0.0, %v217
    %v219 = vpop.f32.mrb[0].mxu0
    %220 = vmatprep.mubr.f32.mxu0 0.0
    %221 = vmatmul.mubr.f32.gmra.mrb[0].mxu0 %v68
    %v222 = vpop.f32.mrb[0].mxu0
    %v223 = vadd.f32 0.0, %v222
    %v224 = vpop.f32.mrb[0].mxu0
    %225 = vmatprep.mubr.f32.mxu0 0.0
    %226 = vmatmul.mubr.f32.gmra.mrb[0].mxu0 %v69
    %v227 = vpop.f32.mrb[0].mxu0
    %v228 = vadd.f32 0.0, %v227
    %v229 = vpop.f32.mrb[0].mxu0
    %230 = vdwg.mxu0
    %s231 = scalar_lea.vmem [#allocation5], 128
    %v232 = vld [vmem:[%s231] sm:$0xff]
    %v233 = vld [vmem:[%s231 + $0x8] sm:$0xff]
    %v234 = vld [vmem:[%s231 + $0x10] sm:$0xff]
    %v235 = vld [vmem:[%s231 + $0x18] sm:$0xff]
    %v236 = vld [vmem:[%s231 + $0x20] sm:$0xff]
    %v237 = vld [vmem:[%s231 + $0x28] sm:$0xff]
    %v238 = vld [vmem:[%s231 + $0x30] sm:$0xff]
    %v239 = vld [vmem:[%s231 + $0x38] sm:$0xff]
    %v240 = vld [vmem:[%s231 + $0x40] sm:$0xff]
    %v241 = vld [vmem:[%s231 + $0x48] sm:$0xff]
    %v242 = vld [vmem:[%s231 + $0x50] sm:$0xff]
    %v243 = vld [vmem:[%s231 + $0x58] sm:$0xff]
    %v244 = vld [vmem:[%s231 + $0x60] sm:$0xff]
    %v245 = vld [vmem:[%s231 + $0x68] sm:$0xff]
    %v246 = vld [vmem:[%s231 + $0x70] sm:$0xff]
    %v247 = vld [vmem:[%s231 + $0x78] sm:$0xff]
    %v248 = vld [vmem:[#allocation7] sm:$0x1]
    %v249 = vlaneseq
    %v250 = vshrl.u32 %v249, 7
    %v251 = vsub.s32 0, %v250
    %v252 = vrot.slane %v248, %v251
    %253 = vmatprep.subr.mxu0 0.0
    %254 = vmatpush1.msra.mxu0 %v232
    %255 = vmatprep.subr.mxu0 0.0
    %256 = vmatpush1.msra.mxu0 %v233
    %257 = vmatprep.subr.mxu0 0.0
    %258 = vmatpush1.msra.mxu0 %v234
    %259 = vmatprep.subr.mxu0 0.0
    %260 = vmatpush1.msra.mxu0 %v235
    %261 = vmatprep.subr.mxu0 0.0
    %262 = vmatpush1.msra.mxu0 %v236
    %263 = vmatprep.subr.mxu0 0.0
    %264 = vmatpush1.msra.mxu0 %v237
    %265 = vmatprep.subr.mxu0 0.0
    %266 = vmatpush1.msra.mxu0 %v238
    %267 = vmatprep.subr.mxu0 0.0
    %268 = vmatpush1.msra.mxu0 %v239
    %269 = vmatprep.subr.mxu0 0.0
    %270 = vmatpush1.msra.mxu0 %v240
    %271 = vmatprep.subr.mxu0 0.0
    %272 = vmatpush1.msra.mxu0 %v241
    %273 = vmatprep.subr.mxu0 0.0
    %274 = vmatpush1.msra.mxu0 %v242
    %275 = vmatprep.subr.mxu0 0.0
    %276 = vmatpush1.msra.mxu0 %v243
    %277 = vmatprep.subr.mxu0 0.0
    %278 = vmatpush1.msra.mxu0 %v244
    %279 = vmatprep.subr.mxu0 0.0
    %280 = vmatpush1.msra.mxu0 %v245
    %281 = vmatprep.subr.mxu0 0.0
    %282 = vmatpush1.msra.mxu0 %v246
    %283 = vmatprep.subr.mxu0 0.0
    %284 = vmatpush1.msra.mxu0 %v247
    %285 = vmatprep.subr.mxu0 0.0
    %286 = vmatpush1.msra.mxu0 0.0
    %287 = vmatprep.subr.mxu0 0.0
    %288 = vmatpush1.msra.mxu0 0.0
    %289 = vmatprep.subr.mxu0 0.0
    %290 = vmatpush1.msra.mxu0 0.0
    %291 = vmatprep.subr.mxu0 0.0
    %292 = vmatpush1.msra.mxu0 0.0
    %293 = vmatprep.subr.mxu0 0.0
    %294 = vmatpush1.msra.mxu0 0.0
    %295 = vmatprep.subr.mxu0 0.0
    %296 = vmatpush1.msra.mxu0 0.0
    %297 = vmatprep.subr.mxu0 0.0
    %298 = vmatpush1.msra.mxu0 0.0
    %299 = vmatprep.subr.mxu0 0.0
    %300 = vmatpush1.msra.mxu0 0.0
    %301 = vmatprep.subr.mxu0 0.0
    %302 = vmatpush1.msra.mxu0 0.0
    %303 = vmatprep.subr.mxu0 0.0
    %304 = vmatpush1.msra.mxu0 0.0
    %305 = vmatprep.subr.mxu0 0.0
    %306 = vmatpush1.msra.mxu0 0.0
    %307 = vmatprep.subr.mxu0 0.0
    %308 = vmatpush1.msra.mxu0 0.0
    %309 = vmatprep.subr.mxu0 0.0
    %310 = vmatpush1.msra.mxu0 0.0
    %311 = vmatprep.subr.mxu0 0.0
    %312 = vmatpush1.msra.mxu0 0.0
    %313 = vmatprep.subr.mxu0 0.0
    %314 = vmatpush1.msra.mxu0 0.0
    %315 = vmatprep.subr.mxu0 0.0
    %316 = vmatpush1.msra.mxu0 0.0
    %317 = vmatprep.mubr.f32.mxu0 0.0
    %318 = vmatmul.mubr.f32.gmra.mrb[0].mxu0 %v54
    %v319 = vpop.f32.mrb[0].mxu0
    %v320 = vadd.f32 %v252, %v319
    %v321 = vpop.f32.mrb[0].mxu0
    %322 = vmatprep.mubr.f32.mxu0 0.0
    %323 = vmatmul.mubr.f32.gmra.mrb[0].mxu0 %v55
    %v324 = vpop.f32.mrb[0].mxu0
    %v325 = vadd.f32 %v252, %v324
    %v326 = vpop.f32.mrb[0].mxu0
    %327 = vmatprep.mubr.f32.mxu0 0.0
    %328 = vmatmul.mubr.f32.gmra.mrb[0].mxu0 %v56
    %v329 = vpop.f32.mrb[0].mxu0
    %v330 = vadd.f32 %v252, %v329
    %v331 = vpop.f32.mrb[0].mxu0
    %332 = vmatprep.mubr.f32.mxu0 0.0
    %333 = vmatmul.mubr.f32.gmra.mrb[0].mxu0 %v57
    %v334 = vpop.f32.mrb[0].mxu0
    %v335 = vadd.f32 %v252, %v334
    %v336 = vpop.f32.mrb[0].mxu0
    %337 = vmatprep.mubr.f32.mxu0 0.0
    %338 = vmatmul.mubr.f32.gmra.mrb[0].mxu0 %v58
    %v339 = vpop.f32.mrb[0].mxu0
    %v340 = vadd.f32 %v252, %v339
    %v341 = vpop.f32.mrb[0].mxu0
    %342 = vmatprep.mubr.f32.mxu0 0.0
    %343 = vmatmul.mubr.f32.gmra.mrb[0].mxu0 %v59
    %v344 = vpop.f32.mrb[0].mxu0
    %v345 = vadd.f32 %v252, %v344
    %v346 = vpop.f32.mrb[0].mxu0
    %347 = vmatprep.mubr.f32.mxu0 0.0
    %348 = vmatmul.mubr.f32.gmra.mrb[0].mxu0 %v60
    %v349 = vpop.f32.mrb[0].mxu0
    %v350 = vadd.f32 %v252, %v349
    %v351 = vpop.f32.mrb[0].mxu0
    %352 = vmatprep.mubr.f32.mxu0 0.0
    %353 = vmatmul.mubr.f32.gmra.mrb[0].mxu0 %v61
    %v354 = vpop.f32.mrb[0].mxu0
    %v355 = vadd.f32 %v252, %v354
    %v356 = vpop.f32.mrb[0].mxu0
    %357 = vmatprep.mubr.f32.mxu0 0.0
    %358 = vmatmul.mubr.f32.gmra.mrb[0].mxu0 %v62
    %v359 = vpop.f32.mrb[0].mxu0
    %v360 = vadd.f32 %v252, %v359
    %v361 = vpop.f32.mrb[0].mxu0
    %362 = vmatprep.mubr.f32.mxu0 0.0
    %363 = vmatmul.mubr.f32.gmra.mrb[0].mxu0 %v63
    %v364 = vpop.f32.mrb[0].mxu0
    %v365 = vadd.f32 %v252, %v364
    %v366 = vpop.f32.mrb[0].mxu0
    %367 = vmatprep.mubr.f32.mxu0 0.0
    %368 = vmatmul.mubr.f32.gmra.mrb[0].mxu0 %v64
    %v369 = vpop.f32.mrb[0].mxu0
    %v370 = vadd.f32 %v252, %v369
    %v371 = vpop.f32.mrb[0].mxu0
    %372 = vmatprep.mubr.f32.mxu0 0.0
    %373 = vmatmul.mubr.f32.gmra.mrb[0].mxu0 %v65
    %v374 = vpop.f32.mrb[0].mxu0
    %v375 = vadd.f32 %v252, %v374
    %v376 = vpop.f32.mrb[0].mxu0
    %377 = vmatprep.mubr.f32.mxu0 0.0
    %378 = vmatmul.mubr.f32.gmra.mrb[0].mxu0 %v66
    %v379 = vpop.f32.mrb[0].mxu0
    %v380 = vadd.f32 %v252, %v379
    %v381 = vpop.f32.mrb[0].mxu0
    %382 = vmatprep.mubr.f32.mxu0 0.0
    %383 = vmatmul.mubr.f32.gmra.mrb[0].mxu0 %v67
    %v384 = vpop.f32.mrb[0].mxu0
    %v385 = vadd.f32 %v252, %v384
    %v386 = vpop.f32.mrb[0].mxu0
    %387 = vmatprep.mubr.f32.mxu0 0.0
    %388 = vmatmul.mubr.f32.gmra.mrb[0].mxu0 %v68
    %v389 = vpop.f32.mrb[0].mxu0
    %v390 = vadd.f32 %v252, %v389
    %v391 = vpop.f32.mrb[0].mxu0
    %392 = vmatprep.mubr.f32.mxu0 0.0
    %393 = vmatmul.mubr.f32.gmra.mrb[0].mxu0 %v69
    %v394 = vpop.f32.mrb[0].mxu0
    %v395 = vadd.f32 %v252, %v394
    %v396 = vpop.f32.mrb[0].mxu0
    %397 = vdwg.mxu0
    %v398 = vmax.f32 %v320, 0.0
    %v399 = vmax.f32 %v325, 0.0
    %v400 = vmax.f32 %v330, 0.0
    %v401 = vmax.f32 %v335, 0.0
    %v402 = vmax.f32 %v340, 0.0
    %v403 = vmax.f32 %v345, 0.0
    %v404 = vmax.f32 %v350, 0.0
    %v405 = vmax.f32 %v355, 0.0
    %v406 = vmax.f32 %v360, 0.0
    %v407 = vmax.f32 %v365, 0.0
    %v408 = vmax.f32 %v370, 0.0
    %v409 = vmax.f32 %v375, 0.0
    %v410 = vmax.f32 %v380, 0.0
    %v411 = vmax.f32 %v385, 0.0
    %v412 = vmax.f32 %v390, 0.0
    %v413 = vmax.f32 %v395, 0.0
    %s414 = scalar_lea.vmem [#allocation5], 256
    %v415 = vld [vmem:[%s414] sm:$0xff]
    %v416 = vld [vmem:[%s414 + $0x8] sm:$0xff]
    %v417 = vld [vmem:[%s414 + $0x10] sm:$0xff]
    %v418 = vld [vmem:[%s414 + $0x18] sm:$0xff]
    %v419 = vld [vmem:[%s414 + $0x20] sm:$0xff]
    %v420 = vld [vmem:[%s414 + $0x28] sm:$0xff]
    %v421 = vld [vmem:[%s414 + $0x30] sm:$0xff]
    %v422 = vld [vmem:[%s414 + $0x38] sm:$0xff]
    %v423 = vld [vmem:[%s414 + $0x40] sm:$0xff]
    %v424 = vld [vmem:[%s414 + $0x48] sm:$0xff]
    %v425 = vld [vmem:[%s414 + $0x50] sm:$0xff]
    %v426 = vld [vmem:[%s414 + $0x58] sm:$0xff]
    %v427 = vld [vmem:[%s414 + $0x60] sm:$0xff]
    %v428 = vld [vmem:[%s414 + $0x68] sm:$0xff]
    %v429 = vld [vmem:[%s414 + $0x70] sm:$0xff]
    %v430 = vld [vmem:[%s414 + $0x78] sm:$0xff]
    %v431 = vld [vmem:[#allocation7 + $0x1] sm:$0x1]
    %v432 = vlaneseq
    %v433 = vshrl.u32 %v432, 7
    %v434 = vsub.s32 0, %v433
    %v435 = vrot.slane %v431, %v434
    %436 = vmatprep.subr.mxu0 0.0
    %437 = vmatpush1.msra.mxu0 %v415
    %438 = vmatprep.subr.mxu0 0.0
    %439 = vmatpush1.msra.mxu0 %v416
    %440 = vmatprep.subr.mxu0 0.0
    %441 = vmatpush1.msra.mxu0 %v417
    %442 = vmatprep.subr.mxu0 0.0
    %443 = vmatpush1.msra.mxu0 %v418
    %444 = vmatprep.subr.mxu0 0.0
    %445 = vmatpush1.msra.mxu0 %v419
    %446 = vmatprep.subr.mxu0 0.0
    %447 = vmatpush1.msra.mxu0 %v420
    %448 = vmatprep.subr.mxu0 0.0
    %449 = vmatpush1.msra.mxu0 %v421
    %450 = vmatprep.subr.mxu0 0.0
    %451 = vmatpush1.msra.mxu0 %v422
    %452 = vmatprep.subr.mxu0 0.0
    %453 = vmatpush1.msra.mxu0 %v423
    %454 = vmatprep.subr.mxu0 0.0
    %455 = vmatpush1.msra.mxu0 %v424
    %456 = vmatprep.subr.mxu0 0.0
    %457 = vmatpush1.msra.mxu0 %v425
    %458 = vmatprep.subr.mxu0 0.0
    %459 = vmatpush1.msra.mxu0 %v426
    %460 = vmatprep.subr.mxu0 0.0
    %461 = vmatpush1.msra.mxu0 %v427
    %462 = vmatprep.subr.mxu0 0.0
    %463 = vmatpush1.msra.mxu0 %v428
    %464 = vmatprep.subr.mxu0 0.0
    %465 = vmatpush1.msra.mxu0 %v429
    %466 = vmatprep.subr.mxu0 0.0
    %467 = vmatpush1.msra.mxu0 %v430
    %468 = vmatprep.subr.mxu0 0.0
    %469 = vmatpush1.msra.mxu0 0.0
    %470 = vmatprep.subr.mxu0 0.0
    %471 = vmatpush1.msra.mxu0 0.0
    %472 = vmatprep.subr.mxu0 0.0
    %473 = vmatpush1.msra.mxu0 0.0
    %474 = vmatprep.subr.mxu0 0.0
    %475 = vmatpush1.msra.mxu0 0.0
    %476 = vmatprep.subr.mxu0 0.0
    %477 = vmatpush1.msra.mxu0 0.0
    %478 = vmatprep.subr.mxu0 0.0
    %479 = vmatpush1.msra.mxu0 0.0
    %480 = vmatprep.subr.mxu0 0.0
    %481 = vmatpush1.msra.mxu0 0.0
    %482 = vmatprep.subr.mxu0 0.0
    %483 = vmatpush1.msra.mxu0 0.0
    %484 = vmatprep.subr.mxu0 0.0
    %485 = vmatpush1.msra.mxu0 0.0
    %486 = vmatprep.subr.mxu0 0.0
    %487 = vmatpush1.msra.mxu0 0.0
    %488 = vmatprep.subr.mxu0 0.0
    %489 = vmatpush1.msra.mxu0 0.0
    %490 = vmatprep.subr.mxu0 0.0
    %491 = vmatpush1.msra.mxu0 0.0
    %492 = vmatprep.subr.mxu0 0.0
    %493 = vmatpush1.msra.mxu0 0.0
    %494 = vmatprep.subr.mxu0 0.0
    %495 = vmatpush1.msra.mxu0 0.0
    %496 = vmatprep.subr.mxu0 0.0
    %497 = vmatpush1.msra.mxu0 0.0
    %498 = vmatprep.subr.mxu0 0.0
    %499 = vmatpush1.msra.mxu0 0.0
    %500 = vmatprep.mubr.f32.mxu0 0.0
    %501 = vmatmul.mubr.f32.gmra.mrb[0].mxu0 %v398
    %v502 = vpop.f32.mrb[0].mxu0
    %v503 = vadd.f32 %v435, %v502
    %v504 = vpop.f32.mrb[0].mxu0
    %505 = vmatprep.mubr.f32.mxu0 0.0
    %506 = vmatmul.mubr.f32.gmra.mrb[0].mxu0 %v399
    %v507 = vpop.f32.mrb[0].mxu0
    %v508 = vadd.f32 %v435, %v507
    %v509 = vpop.f32.mrb[0].mxu0
    %510 = vmatprep.mubr.f32.mxu0 0.0
    %511 = vmatmul.mubr.f32.gmra.mrb[0].mxu0 %v400
    %v512 = vpop.f32.mrb[0].mxu0
    %v513 = vadd.f32 %v435, %v512
    %v514 = vpop.f32.mrb[0].mxu0
    %515 = vmatprep.mubr.f32.mxu0 0.0
    %516 = vmatmul.mubr.f32.gmra.mrb[0].mxu0 %v401
    %v517 = vpop.f32.mrb[0].mxu0
    %v518 = vadd.f32 %v435, %v517
    %v519 = vpop.f32.mrb[0].mxu0
    %520 = vmatprep.mubr.f32.mxu0 0.0
    %521 = vmatmul.mubr.f32.gmra.mrb[0].mxu0 %v402
    %v522 = vpop.f32.mrb[0].mxu0
    %v523 = vadd.f32 %v435, %v522
    %v524 = vpop.f32.mrb[0].mxu0
    %525 = vmatprep.mubr.f32.mxu0 0.0
    %526 = vmatmul.mubr.f32.gmra.mrb[0].mxu0 %v403
    %v527 = vpop.f32.mrb[0].mxu0
    %v528 = vadd.f32 %v435, %v527
    %v529 = vpop.f32.mrb[0].mxu0
    %530 = vmatprep.mubr.f32.mxu0 0.0
    %531 = vmatmul.mubr.f32.gmra.mrb[0].mxu0 %v404
    %v532 = vpop.f32.mrb[0].mxu0
    %v533 = vadd.f32 %v435, %v532
    %v534 = vpop.f32.mrb[0].mxu0
    %535 = vmatprep.mubr.f32.mxu0 0.0
    %536 = vmatmul.mubr.f32.gmra.mrb[0].mxu0 %v405
    %v537 = vpop.f32.mrb[0].mxu0
    %v538 = vadd.f32 %v435, %v537
    %v539 = vpop.f32.mrb[0].mxu0
    %540 = vmatprep.mubr.f32.mxu0 0.0
    %541 = vmatmul.mubr.f32.gmra.mrb[0].mxu0 %v406
    %v542 = vpop.f32.mrb[0].mxu0
    %v543 = vadd.f32 %v435, %v542
    %v544 = vpop.f32.mrb[0].mxu0
    %545 = vmatprep.mubr.f32.mxu0 0.0
    %546 = vmatmul.mubr.f32.gmra.mrb[0].mxu0 %v407
    %v547 = vpop.f32.mrb[0].mxu0
    %v548 = vadd.f32 %v435, %v547
    %v549 = vpop.f32.mrb[0].mxu0
    %550 = vmatprep.mubr.f32.mxu0 0.0
    %551 = vmatmul.mubr.f32.gmra.mrb[0].mxu0 %v408
    %v552 = vpop.f32.mrb[0].mxu0
    %v553 = vadd.f32 %v435, %v552
    %v554 = vpop.f32.mrb[0].mxu0
    %555 = vmatprep.mubr.f32.mxu0 0.0
    %556 = vmatmul.mubr.f32.gmra.mrb[0].mxu0 %v409
    %v557 = vpop.f32.mrb[0].mxu0
    %v558 = vadd.f32 %v435, %v557
    %v559 = vpop.f32.mrb[0].mxu0
    %560 = vmatprep.mubr.f32.mxu0 0.0
    %561 = vmatmul.mubr.f32.gmra.mrb[0].mxu0 %v410
    %v562 = vpop.f32.mrb[0].mxu0
    %v563 = vadd.f32 %v435, %v562
    %v564 = vpop.f32.mrb[0].mxu0
    %565 = vmatprep.mubr.f32.mxu0 0.0
    %566 = vmatmul.mubr.f32.gmra.mrb[0].mxu0 %v411
    %v567 = vpop.f32.mrb[0].mxu0
    %v568 = vadd.f32 %v435, %v567
    %v569 = vpop.f32.mrb[0].mxu0
    %570 = vmatprep.mubr.f32.mxu0 0.0
    %571 = vmatmul.mubr.f32.gmra.mrb[0].mxu0 %v412
    %v572 = vpop.f32.mrb[0].mxu0
    %v573 = vadd.f32 %v435, %v572
    %v574 = vpop.f32.mrb[0].mxu0
    %575 = vmatprep.mubr.f32.mxu0 0.0
    %576 = vmatmul.mubr.f32.gmra.mrb[0].mxu0 %v413
    %v577 = vpop.f32.mrb[0].mxu0
    %v578 = vadd.f32 %v435, %v577
    %v579 = vpop.f32.mrb[0].mxu0
    %580 = vdwg.mxu0
    %s581 = scalar_lea.vmem [#allocation5], 384
    %v582 = vld [vmem:[%s581] sm:$0xff]
    %v583 = vld [vmem:[%s581 + $0x8] sm:$0xff]
    %v584 = vld [vmem:[%s581 + $0x10] sm:$0xff]
    %v585 = vld [vmem:[%s581 + $0x18] sm:$0xff]
    %v586 = vld [vmem:[%s581 + $0x20] sm:$0xff]
    %v587 = vld [vmem:[%s581 + $0x28] sm:$0xff]
    %v588 = vld [vmem:[%s581 + $0x30] sm:$0xff]
    %v589 = vld [vmem:[%s581 + $0x38] sm:$0xff]
    %v590 = vld [vmem:[%s581 + $0x40] sm:$0xff]
    %v591 = vld [vmem:[%s581 + $0x48] sm:$0xff]
    %v592 = vld [vmem:[%s581 + $0x50] sm:$0xff]
    %v593 = vld [vmem:[%s581 + $0x58] sm:$0xff]
    %v594 = vld [vmem:[%s581 + $0x60] sm:$0xff]
    %v595 = vld [vmem:[%s581 + $0x68] sm:$0xff]
    %v596 = vld [vmem:[%s581 + $0x70] sm:$0xff]
    %v597 = vld [vmem:[%s581 + $0x78] sm:$0xff]
    %s598 = scalar_lea.vmem [#allocation5], 512
    %v599 = vld [vmem:[%s598] sm:$0xff]
    %v600 = vld [vmem:[%s598 + $0x8] sm:$0xff]
    %v601 = vld [vmem:[%s598 + $0x10] sm:$0xff]
    %v602 = vld [vmem:[%s598 + $0x18] sm:$0xff]
    %v603 = vld [vmem:[%s598 + $0x20] sm:$0xff]
    %v604 = vld [vmem:[%s598 + $0x28] sm:$0xff]
    %v605 = vld [vmem:[%s598 + $0x30] sm:$0xff]
    %v606 = vld [vmem:[%s598 + $0x38] sm:$0xff]
    %v607 = vld [vmem:[%s598 + $0x40] sm:$0xff]
    %v608 = vld [vmem:[%s598 + $0x48] sm:$0xff]
    %v609 = vld [vmem:[%s598 + $0x50] sm:$0xff]
    %v610 = vld [vmem:[%s598 + $0x58] sm:$0xff]
    %v611 = vld [vmem:[%s598 + $0x60] sm:$0xff]
    %v612 = vld [vmem:[%s598 + $0x68] sm:$0xff]
    %v613 = vld [vmem:[%s598 + $0x70] sm:$0xff]
    %v614 = vld [vmem:[%s598 + $0x78] sm:$0xff]
    %615 = vmatprep.subr.mxu0 0.0
    %616 = vmatpush1.msra.mxu0 %v599
    %617 = vmatprep.subr.mxu0 0.0
    %618 = vmatpush1.msra.mxu0 %v600
    %619 = vmatprep.subr.mxu0 0.0
    %620 = vmatpush1.msra.mxu0 %v601
    %621 = vmatprep.subr.mxu0 0.0
    %622 = vmatpush1.msra.mxu0 %v602
    %623 = vmatprep.subr.mxu0 0.0
    %624 = vmatpush1.msra.mxu0 %v603
    %625 = vmatprep.subr.mxu0 0.0
    %626 = vmatpush1.msra.mxu0 %v604
    %627 = vmatprep.subr.mxu0 0.0
    %628 = vmatpush1.msra.mxu0 %v605
    %629 = vmatprep.subr.mxu0 0.0
    %630 = vmatpush1.msra.mxu0 %v606
    %631 = vmatprep.subr.mxu0 0.0
    %632 = vmatpush1.msra.mxu0 %v607
    %633 = vmatprep.subr.mxu0 0.0
    %634 = vmatpush1.msra.mxu0 %v608
    %635 = vmatprep.subr.mxu0 0.0
    %636 = vmatpush1.msra.mxu0 %v609
    %637 = vmatprep.subr.mxu0 0.0
    %638 = vmatpush1.msra.mxu0 %v610
    %639 = vmatprep.subr.mxu0 0.0
    %640 = vmatpush1.msra.mxu0 %v611
    %641 = vmatprep.subr.mxu0 0.0
    %642 = vmatpush1.msra.mxu0 %v612
    %643 = vmatprep.subr.mxu0 0.0
    %644 = vmatpush1.msra.mxu0 %v613
    %645 = vmatprep.subr.mxu0 0.0
    %646 = vmatpush1.msra.mxu0 %v614
    %647 = vmatprep.subr.mxu0 0.0
    %648 = vmatpush1.msra.mxu0 0.0
    %649 = vmatprep.subr.mxu0 0.0
    %650 = vmatpush1.msra.mxu0 0.0
    %651 = vmatprep.subr.mxu0 0.0
    %652 = vmatpush1.msra.mxu0 0.0
    %653 = vmatprep.subr.mxu0 0.0
    %654 = vmatpush1.msra.mxu0 0.0
    %655 = vmatprep.subr.mxu0 0.0
    %656 = vmatpush1.msra.mxu0 0.0
    %657 = vmatprep.subr.mxu0 0.0
    %658 = vmatpush1.msra.mxu0 0.0
    %659 = vmatprep.subr.mxu0 0.0
    %660 = vmatpush1.msra.mxu0 0.0
    %661 = vmatprep.subr.mxu0 0.0
    %662 = vmatpush1.msra.mxu0 0.0
    %663 = vmatprep.subr.mxu0 0.0
    %664 = vmatpush1.msra.mxu0 0.0
    %665 = vmatprep.subr.mxu0 0.0
    %666 = vmatpush1.msra.mxu0 0.0
    %667 = vmatprep.subr.mxu0 0.0
    %668 = vmatpush1.msra.mxu0 0.0
    %669 = vmatprep.subr.mxu0 0.0
    %670 = vmatpush1.msra.mxu0 0.0
    %671 = vmatprep.subr.mxu0 0.0
    %672 = vmatpush1.msra.mxu0 0.0
    %673 = vmatprep.subr.mxu0 0.0
    %674 = vmatpush1.msra.mxu0 0.0
    %675 = vmatprep.subr.mxu0 0.0
    %676 = vmatpush1.msra.mxu0 0.0
    %677 = vmatprep.subr.mxu0 0.0
    %678 = vmatpush1.msra.mxu0 0.0
    %679 = vmatprep.mubr.f32.mxu0 0.0
    %680 = vmatmul.mubr.f32.gmra.mrb[0].mxu0 %v503
    %v681 = vpop.f32.mrb[0].mxu0
    %v682 = vadd.f32 0.0, %v681
    %v683 = vpop.f32.mrb[0].mxu0
    %684 = vmatprep.mubr.f32.mxu0 0.0
    %685 = vmatmul.mubr.f32.gmra.mrb[0].mxu0 %v508
    %v686 = vpop.f32.mrb[0].mxu0
    %v687 = vadd.f32 0.0, %v686
    %v688 = vpop.f32.mrb[0].mxu0
    %689 = vmatprep.mubr.f32.mxu0 0.0
    %690 = vmatmul.mubr.f32.gmra.mrb[0].mxu0 %v513
    %v691 = vpop.f32.mrb[0].mxu0
    %v692 = vadd.f32 0.0, %v691
    %v693 = vpop.f32.mrb[0].mxu0
    %694 = vmatprep.mubr.f32.mxu0 0.0
    %695 = vmatmul.mubr.f32.gmra.mrb[0].mxu0 %v518
    %v696 = vpop.f32.mrb[0].mxu0
    %v697 = vadd.f32 0.0, %v696
    %v698 = vpop.f32.mrb[0].mxu0
    %699 = vmatprep.mubr.f32.mxu0 0.0
    %700 = vmatmul.mubr.f32.gmra.mrb[0].mxu0 %v523
    %v701 = vpop.f32.mrb[0].mxu0
    %v702 = vadd.f32 0.0, %v701
    %v703 = vpop.f32.mrb[0].mxu0
    %704 = vmatprep.mubr.f32.mxu0 0.0
    %705 = vmatmul.mubr.f32.gmra.mrb[0].mxu0 %v528
    %v706 = vpop.f32.mrb[0].mxu0
    %v707 = vadd.f32 0.0, %v706
    %v708 = vpop.f32.mrb[0].mxu0
    %709 = vmatprep.mubr.f32.mxu0 0.0
    %710 = vmatmul.mubr.f32.gmra.mrb[0].mxu0 %v533
    %v711 = vpop.f32.mrb[0].mxu0
    %v712 = vadd.f32 0.0, %v711
    %v713 = vpop.f32.mrb[0].mxu0
    %714 = vmatprep.mubr.f32.mxu0 0.0
    %715 = vmatmul.mubr.f32.gmra.mrb[0].mxu0 %v538
    %v716 = vpop.f32.mrb[0].mxu0
    %v717 = vadd.f32 0.0, %v716
    %v718 = vpop.f32.mrb[0].mxu0
    %719 = vmatprep.mubr.f32.mxu0 0.0
    %720 = vmatmul.mubr.f32.gmra.mrb[0].mxu0 %v543
    %v721 = vpop.f32.mrb[0].mxu0
    %v722 = vadd.f32 0.0, %v721
    %v723 = vpop.f32.mrb[0].mxu0
    %724 = vmatprep.mubr.f32.mxu0 0.0
    %725 = vmatmul.mubr.f32.gmra.mrb[0].mxu0 %v548
    %v726 = vpop.f32.mrb[0].mxu0
    %v727 = vadd.f32 0.0, %v726
    %v728 = vpop.f32.mrb[0].mxu0
    %729 = vmatprep.mubr.f32.mxu0 0.0
    %730 = vmatmul.mubr.f32.gmra.mrb[0].mxu0 %v553
    %v731 = vpop.f32.mrb[0].mxu0
    %v732 = vadd.f32 0.0, %v731
    %v733 = vpop.f32.mrb[0].mxu0
    %734 = vmatprep.mubr.f32.mxu0 0.0
    %735 = vmatmul.mubr.f32.gmra.mrb[0].mxu0 %v558
    %v736 = vpop.f32.mrb[0].mxu0
    %v737 = vadd.f32 0.0, %v736
    %v738 = vpop.f32.mrb[0].mxu0
    %739 = vmatprep.mubr.f32.mxu0 0.0
    %740 = vmatmul.mubr.f32.gmra.mrb[0].mxu0 %v563
    %v741 = vpop.f32.mrb[0].mxu0
    %v742 = vadd.f32 0.0, %v741
    %v743 = vpop.f32.mrb[0].mxu0
    %744 = vmatprep.mubr.f32.mxu0 0.0
    %745 = vmatmul.mubr.f32.gmra.mrb[0].mxu0 %v568
    %v746 = vpop.f32.mrb[0].mxu0
    %v747 = vadd.f32 0.0, %v746
    %v748 = vpop.f32.mrb[0].mxu0
    %749 = vmatprep.mubr.f32.mxu0 0.0
    %750 = vmatmul.mubr.f32.gmra.mrb[0].mxu0 %v573
    %v751 = vpop.f32.mrb[0].mxu0
    %v752 = vadd.f32 0.0, %v751
    %v753 = vpop.f32.mrb[0].mxu0
    %754 = vmatprep.mubr.f32.mxu0 0.0
    %755 = vmatmul.mubr.f32.gmra.mrb[0].mxu0 %v578
    %v756 = vpop.f32.mrb[0].mxu0
    %v757 = vadd.f32 0.0, %v756
    %v758 = vpop.f32.mrb[0].mxu0
    %759 = vdwg.mxu0
    %760 = vmatprep.subr.mxu0 0.0
    %761 = vmatpush1.msra.mxu0 %v582
    %762 = vmatprep.subr.mxu0 0.0
    %763 = vmatpush1.msra.mxu0 %v583
    %764 = vmatprep.subr.mxu0 0.0
    %765 = vmatpush1.msra.mxu0 %v584
    %766 = vmatprep.subr.mxu0 0.0
    %767 = vmatpush1.msra.mxu0 %v585
    %768 = vmatprep.subr.mxu0 0.0
    %769 = vmatpush1.msra.mxu0 %v586
    %770 = vmatprep.subr.mxu0 0.0
    %771 = vmatpush1.msra.mxu0 %v587
    %772 = vmatprep.subr.mxu0 0.0
    %773 = vmatpush1.msra.mxu0 %v588
    %774 = vmatprep.subr.mxu0 0.0
    %775 = vmatpush1.msra.mxu0 %v589
    %776 = vmatprep.subr.mxu0 0.0
    %777 = vmatpush1.msra.mxu0 %v590
    %778 = vmatprep.subr.mxu0 0.0
    %779 = vmatpush1.msra.mxu0 %v591
    %780 = vmatprep.subr.mxu0 0.0
    %781 = vmatpush1.msra.mxu0 %v592
    %782 = vmatprep.subr.mxu0 0.0
    %783 = vmatpush1.msra.mxu0 %v593
    %784 = vmatprep.subr.mxu0 0.0
    %785 = vmatpush1.msra.mxu0 %v594
    %786 = vmatprep.subr.mxu0 0.0
    %787 = vmatpush1.msra.mxu0 %v595
    %788 = vmatprep.subr.mxu0 0.0
    %789 = vmatpush1.msra.mxu0 %v596
    %790 = vmatprep.subr.mxu0 0.0
    %791 = vmatpush1.msra.mxu0 %v597
    %792 = vmatprep.subr.mxu0 0.0
    %793 = vmatpush1.msra.mxu0 0.0
    %794 = vmatprep.subr.mxu0 0.0
    %795 = vmatpush1.msra.mxu0 0.0
    %796 = vmatprep.subr.mxu0 0.0
    %797 = vmatpush1.msra.mxu0 0.0
    %798 = vmatprep.subr.mxu0 0.0
    %799 = vmatpush1.msra.mxu0 0.0
    %800 = vmatprep.subr.mxu0 0.0
    %801 = vmatpush1.msra.mxu0 0.0
    %802 = vmatprep.subr.mxu0 0.0
    %803 = vmatpush1.msra.mxu0 0.0
    %804 = vmatprep.subr.mxu0 0.0
    %805 = vmatpush1.msra.mxu0 0.0
    %806 = vmatprep.subr.mxu0 0.0
    %807 = vmatpush1.msra.mxu0 0.0
    %808 = vmatprep.subr.mxu0 0.0
    %809 = vmatpush1.msra.mxu0 0.0
    %810 = vmatprep.subr.mxu0 0.0
    %811 = vmatpush1.msra.mxu0 0.0
    %812 = vmatprep.subr.mxu0 0.0
    %813 = vmatpush1.msra.mxu0 0.0
    %814 = vmatprep.subr.mxu0 0.0
    %815 = vmatpush1.msra.mxu0 0.0
    %816 = vmatprep.subr.mxu0 0.0
    %817 = vmatpush1.msra.mxu0 0.0
    %818 = vmatprep.subr.mxu0 0.0
    %819 = vmatpush1.msra.mxu0 0.0
    %820 = vmatprep.subr.mxu0 0.0
    %821 = vmatpush1.msra.mxu0 0.0
    %822 = vmatprep.subr.mxu0 0.0
    %823 = vmatpush1.msra.mxu0 0.0
    %824 = vmatprep.mubr.f32.mxu0 0.0
    %825 = vmatmul.mubr.f32.gmra.mrb[0].mxu0 %v153
    %v826 = vpop.f32.mrb[0].mxu0
    %v827 = vadd.f32 %v682, %v826
    %v828 = vpop.f32.mrb[0].mxu0
    %829 = vmatprep.mubr.f32.mxu0 0.0
    %830 = vmatmul.mubr.f32.gmra.mrb[0].mxu0 %v158
    %v831 = vpop.f32.mrb[0].mxu0
    %v832 = vadd.f32 %v687, %v831
    %v833 = vpop.f32.mrb[0].mxu0
    %834 = vmatprep.mubr.f32.mxu0 0.0
    %835 = vmatmul.mubr.f32.gmra.mrb[0].mxu0 %v163
    %v836 = vpop.f32.mrb[0].mxu0
    %v837 = vadd.f32 %v692, %v836
    %v838 = vpop.f32.mrb[0].mxu0
    %839 = vmatprep.mubr.f32.mxu0 0.0
    %840 = vmatmul.mubr.f32.gmra.mrb[0].mxu0 %v168
    %v841 = vpop.f32.mrb[0].mxu0
    %v842 = vadd.f32 %v697, %v841
    %v843 = vpop.f32.mrb[0].mxu0
    %844 = vmatprep.mubr.f32.mxu0 0.0
    %845 = vmatmul.mubr.f32.gmra.mrb[0].mxu0 %v173
    %v846 = vpop.f32.mrb[0].mxu0
    %v847 = vadd.f32 %v702, %v846
    %v848 = vpop.f32.mrb[0].mxu0
    %849 = vmatprep.mubr.f32.mxu0 0.0
    %850 = vmatmul.mubr.f32.gmra.mrb[0].mxu0 %v178
    %v851 = vpop.f32.mrb[0].mxu0
    %v852 = vadd.f32 %v707, %v851
    %v853 = vpop.f32.mrb[0].mxu0
    %854 = vmatprep.mubr.f32.mxu0 0.0
    %855 = vmatmul.mubr.f32.gmra.mrb[0].mxu0 %v183
    %v856 = vpop.f32.mrb[0].mxu0
    %v857 = vadd.f32 %v712, %v856
    %v858 = vpop.f32.mrb[0].mxu0
    %859 = vmatprep.mubr.f32.mxu0 0.0
    %860 = vmatmul.mubr.f32.gmra.mrb[0].mxu0 %v188
    %v861 = vpop.f32.mrb[0].mxu0
    %v862 = vadd.f32 %v717, %v861
    %v863 = vpop.f32.mrb[0].mxu0
    %864 = vmatprep.mubr.f32.mxu0 0.0
    %865 = vmatmul.mubr.f32.gmra.mrb[0].mxu0 %v193
    %v866 = vpop.f32.mrb[0].mxu0
    %v867 = vadd.f32 %v722, %v866
    %v868 = vpop.f32.mrb[0].mxu0
    %869 = vmatprep.mubr.f32.mxu0 0.0
    %870 = vmatmul.mubr.f32.gmra.mrb[0].mxu0 %v198
    %v871 = vpop.f32.mrb[0].mxu0
    %v872 = vadd.f32 %v727, %v871
    %v873 = vpop.f32.mrb[0].mxu0
    %874 = vmatprep.mubr.f32.mxu0 0.0
    %875 = vmatmul.mubr.f32.gmra.mrb[0].mxu0 %v203
    %v876 = vpop.f32.mrb[0].mxu0
    %v877 = vadd.f32 %v732, %v876
    %v878 = vpop.f32.mrb[0].mxu0
    %879 = vmatprep.mubr.f32.mxu0 0.0
    %880 = vmatmul.mubr.f32.gmra.mrb[0].mxu0 %v208
    %v881 = vpop.f32.mrb[0].mxu0
    %v882 = vadd.f32 %v737, %v881
    %v883 = vpop.f32.mrb[0].mxu0
    %884 = vmatprep.mubr.f32.mxu0 0.0
    %885 = vmatmul.mubr.f32.gmra.mrb[0].mxu0 %v213
    %v886 = vpop.f32.mrb[0].mxu0
    %v887 = vadd.f32 %v742, %v886
    %v888 = vpop.f32.mrb[0].mxu0
    %889 = vmatprep.mubr.f32.mxu0 0.0
    %890 = vmatmul.mubr.f32.gmra.mrb[0].mxu0 %v218
    %v891 = vpop.f32.mrb[0].mxu0
    %v892 = vadd.f32 %v747, %v891
    %v893 = vpop.f32.mrb[0].mxu0
    %894 = vmatprep.mubr.f32.mxu0 0.0
    %895 = vmatmul.mubr.f32.gmra.mrb[0].mxu0 %v223
    %v896 = vpop.f32.mrb[0].mxu0
    %v897 = vadd.f32 %v752, %v896
    %v898 = vpop.f32.mrb[0].mxu0
    %899 = vmatprep.mubr.f32.mxu0 0.0
    %900 = vmatmul.mubr.f32.gmra.mrb[0].mxu0 %v228
    %v901 = vpop.f32.mrb[0].mxu0
    %v902 = vadd.f32 %v757, %v901
    %v903 = vpop.f32.mrb[0].mxu0
    %904 = vdwg.mxu0
    %v905 = vld [vmem:[#allocation7 + $0x2] sm:$0x1]
    %v906 = vlaneseq
    %v907 = vshrl.u32 %v906, 7
    %v908 = vsub.s32 0, %v907
    %v909 = vrot.slane %v905, %v908
    %v910 = vadd.f32 %v827, %v909
    %v911 = vadd.f32 %v832, %v909
    %v912 = vadd.f32 %v837, %v909
    %v913 = vadd.f32 %v842, %v909
    %v914 = vadd.f32 %v847, %v909
    %v915 = vadd.f32 %v852, %v909
    %v916 = vadd.f32 %v857, %v909
    %v917 = vadd.f32 %v862, %v909
    %v918 = vadd.f32 %v867, %v909
    %v919 = vadd.f32 %v872, %v909
    %v920 = vadd.f32 %v877, %v909
    %v921 = vadd.f32 %v882, %v909
    %v922 = vadd.f32 %v887, %v909
    %v923 = vadd.f32 %v892, %v909
    %v924 = vadd.f32 %v897, %v909
    %v925 = vadd.f32 %v902, %v909
    %v926 = vmax.f32 %v910, 0.0
    %v927 = vmax.f32 %v911, 0.0
    %v928 = vmax.f32 %v912, 0.0
    %v929 = vmax.f32 %v913, 0.0
    %v930 = vmax.f32 %v914, 0.0
    %v931 = vmax.f32 %v915, 0.0
    %v932 = vmax.f32 %v916, 0.0
    %v933 = vmax.f32 %v917, 0.0
    %v934 = vmax.f32 %v918, 0.0
    %v935 = vmax.f32 %v919, 0.0
    %v936 = vmax.f32 %v920, 0.0
    %v937 = vmax.f32 %v921, 0.0
    %v938 = vmax.f32 %v922, 0.0
    %v939 = vmax.f32 %v923, 0.0
    %v940 = vmax.f32 %v924, 0.0
    %v941 = vmax.f32 %v925, 0.0
    %s942 = scalar_lea.vmem [#allocation5], 640
    %v943 = vld [vmem:[%s942] sm:$0xff]
    %v944 = vld [vmem:[%s942 + $0x8] sm:$0xff]
    %v945 = vld [vmem:[%s942 + $0x10] sm:$0xff]
    %v946 = vld [vmem:[%s942 + $0x18] sm:$0xff]
    %v947 = vld [vmem:[%s942 + $0x20] sm:$0xff]
    %v948 = vld [vmem:[%s942 + $0x28] sm:$0xff]
    %v949 = vld [vmem:[%s942 + $0x30] sm:$0xff]
    %v950 = vld [vmem:[%s942 + $0x38] sm:$0xff]
    %v951 = vld [vmem:[%s942 + $0x40] sm:$0xff]
    %v952 = vld [vmem:[%s942 + $0x48] sm:$0xff]
    %v953 = vld [vmem:[%s942 + $0x50] sm:$0xff]
    %v954 = vld [vmem:[%s942 + $0x58] sm:$0xff]
    %v955 = vld [vmem:[%s942 + $0x60] sm:$0xff]
    %v956 = vld [vmem:[%s942 + $0x68] sm:$0xff]
    %v957 = vld [vmem:[%s942 + $0x70] sm:$0xff]
    %v958 = vld [vmem:[%s942 + $0x78] sm:$0xff]
    %v959 = vld [vmem:[#allocation7 + $0x3] sm:$0x1]
    %v960 = vlaneseq
    %v961 = vshrl.u32 %v960, 7
    %v962 = vsub.s32 0, %v961
    %v963 = vrot.slane %v959, %v962
    %964 = vmatprep.subr.mxu0 0.0
    %965 = vmatpush1.msra.mxu0 %v943
    %966 = vmatprep.subr.mxu0 0.0
    %967 = vmatpush1.msra.mxu0 %v944
    %968 = vmatprep.subr.mxu0 0.0
    %969 = vmatpush1.msra.mxu0 %v945
    %970 = vmatprep.subr.mxu0 0.0
    %971 = vmatpush1.msra.mxu0 %v946
    %972 = vmatprep.subr.mxu0 0.0
    %973 = vmatpush1.msra.mxu0 %v947
    %974 = vmatprep.subr.mxu0 0.0
    %975 = vmatpush1.msra.mxu0 %v948
    %976 = vmatprep.subr.mxu0 0.0
    %977 = vmatpush1.msra.mxu0 %v949
    %978 = vmatprep.subr.mxu0 0.0
    %979 = vmatpush1.msra.mxu0 %v950
    %980 = vmatprep.subr.mxu0 0.0
    %981 = vmatpush1.msra.mxu0 %v951
    %982 = vmatprep.subr.mxu0 0.0
    %983 = vmatpush1.msra.mxu0 %v952
    %984 = vmatprep.subr.mxu0 0.0
    %985 = vmatpush1.msra.mxu0 %v953
    %986 = vmatprep.subr.mxu0 0.0
    %987 = vmatpush1.msra.mxu0 %v954
    %988 = vmatprep.subr.mxu0 0.0
    %989 = vmatpush1.msra.mxu0 %v955
    %990 = vmatprep.subr.mxu0 0.0
    %991 = vmatpush1.msra.mxu0 %v956
    %992 = vmatprep.subr.mxu0 0.0
    %993 = vmatpush1.msra.mxu0 %v957
    %994 = vmatprep.subr.mxu0 0.0
    %995 = vmatpush1.msra.mxu0 %v958
    %996 = vmatprep.subr.mxu0 0.0
    %997 = vmatpush1.msra.mxu0 0.0
    %998 = vmatprep.subr.mxu0 0.0
    %999 = vmatpush1.msra.mxu0 0.0
    %1000 = vmatprep.subr.mxu0 0.0
    %1001 = vmatpush1.msra.mxu0 0.0
    %1002 = vmatprep.subr.mxu0 0.0
    %1003 = vmatpush1.msra.mxu0 0.0
    %1004 = vmatprep.subr.mxu0 0.0
    %1005 = vmatpush1.msra.mxu0 0.0
    %1006 = vmatprep.subr.mxu0 0.0
    %1007 = vmatpush1.msra.mxu0 0.0
    %1008 = vmatprep.subr.mxu0 0.0
    %1009 = vmatpush1.msra.mxu0 0.0
    %1010 = vmatprep.subr.mxu0 0.0
    %1011 = vmatpush1.msra.mxu0 0.0
    %1012 = vmatprep.subr.mxu0 0.0
    %1013 = vmatpush1.msra.mxu0 0.0
    %1014 = vmatprep.subr.mxu0 0.0
    %1015 = vmatpush1.msra.mxu0 0.0
    %1016 = vmatprep.subr.mxu0 0.0
    %1017 = vmatpush1.msra.mxu0 0.0
    %1018 = vmatprep.subr.mxu0 0.0
    %1019 = vmatpush1.msra.mxu0 0.0
    %1020 = vmatprep.subr.mxu0 0.0
    %1021 = vmatpush1.msra.mxu0 0.0
    %1022 = vmatprep.subr.mxu0 0.0
    %1023 = vmatpush1.msra.mxu0 0.0
    %1024 = vmatprep.subr.mxu0 0.0
    %1025 = vmatpush1.msra.mxu0 0.0
    %1026 = vmatprep.subr.mxu0 0.0
    %1027 = vmatpush1.msra.mxu0 0.0
    %1028 = vmatprep.mubr.f32.mxu0 0.0
    %1029 = vmatmul.mubr.f32.gmra.mrb[0].mxu0 %v926
    %v1030 = vpop.f32.mrb[0].mxu0
    %v1031 = vadd.f32 %v963, %v1030
    %v1032 = vpop.f32.mrb[0].mxu0
    %1033 = vmatprep.mubr.f32.mxu0 0.0
    %1034 = vmatmul.mubr.f32.gmra.mrb[0].mxu0 %v927
    %v1035 = vpop.f32.mrb[0].mxu0
    %v1036 = vadd.f32 %v963, %v1035
    %v1037 = vpop.f32.mrb[0].mxu0
    %1038 = vmatprep.mubr.f32.mxu0 0.0
    %1039 = vmatmul.mubr.f32.gmra.mrb[0].mxu0 %v928
    %v1040 = vpop.f32.mrb[0].mxu0
    %v1041 = vadd.f32 %v963, %v1040
    %v1042 = vpop.f32.mrb[0].mxu0
    %1043 = vmatprep.mubr.f32.mxu0 0.0
    %1044 = vmatmul.mubr.f32.gmra.mrb[0].mxu0 %v929
    %v1045 = vpop.f32.mrb[0].mxu0
    %v1046 = vadd.f32 %v963, %v1045
    %v1047 = vpop.f32.mrb[0].mxu0
    %1048 = vmatprep.mubr.f32.mxu0 0.0
    %1049 = vmatmul.mubr.f32.gmra.mrb[0].mxu0 %v930
    %v1050 = vpop.f32.mrb[0].mxu0
    %v1051 = vadd.f32 %v963, %v1050
    %v1052 = vpop.f32.mrb[0].mxu0
    %1053 = vmatprep.mubr.f32.mxu0 0.0
    %1054 = vmatmul.mubr.f32.gmra.mrb[0].mxu0 %v931
    %v1055 = vpop.f32.mrb[0].mxu0
    %v1056 = vadd.f32 %v963, %v1055
    %v1057 = vpop.f32.mrb[0].mxu0
    %1058 = vmatprep.mubr.f32.mxu0 0.0
    %1059 = vmatmul.mubr.f32.gmra.mrb[0].mxu0 %v932
    %v1060 = vpop.f32.mrb[0].mxu0
    %v1061 = vadd.f32 %v963, %v1060
    %v1062 = vpop.f32.mrb[0].mxu0
    %1063 = vmatprep.mubr.f32.mxu0 0.0
    %1064 = vmatmul.mubr.f32.gmra.mrb[0].mxu0 %v933
    %v1065 = vpop.f32.mrb[0].mxu0
    %v1066 = vadd.f32 %v963, %v1065
    %v1067 = vpop.f32.mrb[0].mxu0
    %1068 = vmatprep.mubr.f32.mxu0 0.0
    %1069 = vmatmul.mubr.f32.gmra.mrb[0].mxu0 %v934
    %v1070 = vpop.f32.mrb[0].mxu0
    %v1071 = vadd.f32 %v963, %v1070
    %v1072 = vpop.f32.mrb[0].mxu0
    %1073 = vmatprep.mubr.f32.mxu0 0.0
    %1074 = vmatmul.mubr.f32.gmra.mrb[0].mxu0 %v935
    %v1075 = vpop.f32.mrb[0].mxu0
    %v1076 = vadd.f32 %v963, %v1075
    %v1077 = vpop.f32.mrb[0].mxu0
    %1078 = vmatprep.mubr.f32.mxu0 0.0
    %1079 = vmatmul.mubr.f32.gmra.mrb[0].mxu0 %v936
    %v1080 = vpop.f32.mrb[0].mxu0
    %v1081 = vadd.f32 %v963, %v1080
    %v1082 = vpop.f32.mrb[0].mxu0
    %1083 = vmatprep.mubr.f32.mxu0 0.0
    %1084 = vmatmul.mubr.f32.gmra.mrb[0].mxu0 %v937
    %v1085 = vpop.f32.mrb[0].mxu0
    %v1086 = vadd.f32 %v963, %v1085
    %v1087 = vpop.f32.mrb[0].mxu0
    %1088 = vmatprep.mubr.f32.mxu0 0.0
    %1089 = vmatmul.mubr.f32.gmra.mrb[0].mxu0 %v938
    %v1090 = vpop.f32.mrb[0].mxu0
    %v1091 = vadd.f32 %v963, %v1090
    %v1092 = vpop.f32.mrb[0].mxu0
    %1093 = vmatprep.mubr.f32.mxu0 0.0
    %1094 = vmatmul.mubr.f32.gmra.mrb[0].mxu0 %v939
    %v1095 = vpop.f32.mrb[0].mxu0
    %v1096 = vadd.f32 %v963, %v1095
    %v1097 = vpop.f32.mrb[0].mxu0
    %1098 = vmatprep.mubr.f32.mxu0 0.0
    %1099 = vmatmul.mubr.f32.gmra.mrb[0].mxu0 %v940
    %v1100 = vpop.f32.mrb[0].mxu0
    %v1101 = vadd.f32 %v963, %v1100
    %v1102 = vpop.f32.mrb[0].mxu0
    %1103 = vmatprep.mubr.f32.mxu0 0.0
    %1104 = vmatmul.mubr.f32.gmra.mrb[0].mxu0 %v941
    %v1105 = vpop.f32.mrb[0].mxu0
    %v1106 = vadd.f32 %v963, %v1105
    %v1107 = vpop.f32.mrb[0].mxu0
    %1108 = vdwg.mxu0
    %s1109 = scalar_lea.vmem [#allocation5], 768
    %v1110 = vld [vmem:[%s1109] sm:$0xff]
    %v1111 = vld [vmem:[%s1109 + $0x8] sm:$0xff]
    %v1112 = vld [vmem:[%s1109 + $0x10] sm:$0xff]
    %v1113 = vld [vmem:[%s1109 + $0x18] sm:$0xff]
    %v1114 = vld [vmem:[%s1109 + $0x20] sm:$0xff]
    %v1115 = vld [vmem:[%s1109 + $0x28] sm:$0xff]
    %v1116 = vld [vmem:[%s1109 + $0x30] sm:$0xff]
    %v1117 = vld [vmem:[%s1109 + $0x38] sm:$0xff]
    %v1118 = vld [vmem:[%s1109 + $0x40] sm:$0xff]
    %v1119 = vld [vmem:[%s1109 + $0x48] sm:$0xff]
    %v1120 = vld [vmem:[%s1109 + $0x50] sm:$0xff]
    %v1121 = vld [vmem:[%s1109 + $0x58] sm:$0xff]
    %v1122 = vld [vmem:[%s1109 + $0x60] sm:$0xff]
    %v1123 = vld [vmem:[%s1109 + $0x68] sm:$0xff]
    %v1124 = vld [vmem:[%s1109 + $0x70] sm:$0xff]
    %v1125 = vld [vmem:[%s1109 + $0x78] sm:$0xff]
    %v1126 = vld [vmem:[#allocation7 + $0x4] sm:$0x1]
    %v1127 = vlaneseq
    %v1128 = vshrl.u32 %v1127, 7
    %v1129 = vsub.s32 0, %v1128
    %v1130 = vrot.slane %v1126, %v1129
    %1131 = vmatprep.subr.mxu0 0.0
    %1132 = vmatpush1.msra.mxu0 %v1110
    %1133 = vmatprep.subr.mxu0 0.0
    %1134 = vmatpush1.msra.mxu0 %v1111
    %1135 = vmatprep.subr.mxu0 0.0
    %1136 = vmatpush1.msra.mxu0 %v1112
    %1137 = vmatprep.subr.mxu0 0.0
    %1138 = vmatpush1.msra.mxu0 %v1113
    %1139 = vmatprep.subr.mxu0 0.0
    %1140 = vmatpush1.msra.mxu0 %v1114
    %1141 = vmatprep.subr.mxu0 0.0
    %1142 = vmatpush1.msra.mxu0 %v1115
    %1143 = vmatprep.subr.mxu0 0.0
    %1144 = vmatpush1.msra.mxu0 %v1116
    %1145 = vmatprep.subr.mxu0 0.0
    %1146 = vmatpush1.msra.mxu0 %v1117
    %1147 = vmatprep.subr.mxu0 0.0
    %1148 = vmatpush1.msra.mxu0 %v1118
    %1149 = vmatprep.subr.mxu0 0.0
    %1150 = vmatpush1.msra.mxu0 %v1119
    %1151 = vmatprep.subr.mxu0 0.0
    %1152 = vmatpush1.msra.mxu0 %v1120
    %1153 = vmatprep.subr.mxu0 0.0
    %1154 = vmatpush1.msra.mxu0 %v1121
    %1155 = vmatprep.subr.mxu0 0.0
    %1156 = vmatpush1.msra.mxu0 %v1122
    %1157 = vmatprep.subr.mxu0 0.0
    %1158 = vmatpush1.msra.mxu0 %v1123
    %1159 = vmatprep.subr.mxu0 0.0
    %1160 = vmatpush1.msra.mxu0 %v1124
    %1161 = vmatprep.subr.mxu0 0.0
    %1162 = vmatpush1.msra.mxu0 %v1125
    %1163 = vmatprep.subr.mxu0 0.0
    %1164 = vmatpush1.msra.mxu0 0.0
    %1165 = vmatprep.subr.mxu0 0.0
    %1166 = vmatpush1.msra.mxu0 0.0
    %1167 = vmatprep.subr.mxu0 0.0
    %1168 = vmatpush1.msra.mxu0 0.0
    %1169 = vmatprep.subr.mxu0 0.0
    %1170 = vmatpush1.msra.mxu0 0.0
    %1171 = vmatprep.subr.mxu0 0.0
    %1172 = vmatpush1.msra.mxu0 0.0
    %1173 = vmatprep.subr.mxu0 0.0
    %1174 = vmatpush1.msra.mxu0 0.0
    %1175 = vmatprep.subr.mxu0 0.0
    %1176 = vmatpush1.msra.mxu0 0.0
    %1177 = vmatprep.subr.mxu0 0.0
    %1178 = vmatpush1.msra.mxu0 0.0
    %1179 = vmatprep.subr.mxu0 0.0
    %1180 = vmatpush1.msra.mxu0 0.0
    %1181 = vmatprep.subr.mxu0 0.0
    %1182 = vmatpush1.msra.mxu0 0.0
    %1183 = vmatprep.subr.mxu0 0.0
    %1184 = vmatpush1.msra.mxu0 0.0
    %1185 = vmatprep.subr.mxu0 0.0
    %1186 = vmatpush1.msra.mxu0 0.0
    %1187 = vmatprep.subr.mxu0 0.0
    %1188 = vmatpush1.msra.mxu0 0.0
    %1189 = vmatprep.subr.mxu0 0.0
    %1190 = vmatpush1.msra.mxu0 0.0
    %1191 = vmatprep.subr.mxu0 0.0
    %1192 = vmatpush1.msra.mxu0 0.0
    %1193 = vmatprep.subr.mxu0 0.0
    %1194 = vmatpush1.msra.mxu0 0.0
    %1195 = vmatprep.mubr.f32.mxu0 0.0
    %1196 = vmatmul.mubr.f32.gmra.mrb[0].mxu0 %v503
    %v1197 = vpop.f32.mrb[0].mxu0
    %v1198 = vadd.f32 %v1130, %v1197
    %v1199 = vpop.f32.mrb[0].mxu0
    %1200 = vmatprep.mubr.f32.mxu0 0.0
    %1201 = vmatmul.mubr.f32.gmra.mrb[0].mxu0 %v508
    %v1202 = vpop.f32.mrb[0].mxu0
    %v1203 = vadd.f32 %v1130, %v1202
    %v1204 = vpop.f32.mrb[0].mxu0
    %1205 = vmatprep.mubr.f32.mxu0 0.0
    %1206 = vmatmul.mubr.f32.gmra.mrb[0].mxu0 %v513
    %v1207 = vpop.f32.mrb[0].mxu0
    %v1208 = vadd.f32 %v1130, %v1207
    %v1209 = vpop.f32.mrb[0].mxu0
    %1210 = vmatprep.mubr.f32.mxu0 0.0
    %1211 = vmatmul.mubr.f32.gmra.mrb[0].mxu0 %v518
    %v1212 = vpop.f32.mrb[0].mxu0
    %v1213 = vadd.f32 %v1130, %v1212
    %v1214 = vpop.f32.mrb[0].mxu0
    %1215 = vmatprep.mubr.f32.mxu0 0.0
    %1216 = vmatmul.mubr.f32.gmra.mrb[0].mxu0 %v523
    %v1217 = vpop.f32.mrb[0].mxu0
    %v1218 = vadd.f32 %v1130, %v1217
    %v1219 = vpop.f32.mrb[0].mxu0
    %1220 = vmatprep.mubr.f32.mxu0 0.0
    %1221 = vmatmul.mubr.f32.gmra.mrb[0].mxu0 %v528
    %v1222 = vpop.f32.mrb[0].mxu0
    %v1223 = vadd.f32 %v1130, %v1222
    %v1224 = vpop.f32.mrb[0].mxu0
    %1225 = vmatprep.mubr.f32.mxu0 0.0
    %1226 = vmatmul.mubr.f32.gmra.mrb[0].mxu0 %v533
    %v1227 = vpop.f32.mrb[0].mxu0
    %v1228 = vadd.f32 %v1130, %v1227
    %v1229 = vpop.f32.mrb[0].mxu0
    %1230 = vmatprep.mubr.f32.mxu0 0.0
    %1231 = vmatmul.mubr.f32.gmra.mrb[0].mxu0 %v538
    %v1232 = vpop.f32.mrb[0].mxu0
    %v1233 = vadd.f32 %v1130, %v1232
    %v1234 = vpop.f32.mrb[0].mxu0
    %1235 = vmatprep.mubr.f32.mxu0 0.0
    %1236 = vmatmul.mubr.f32.gmra.mrb[0].mxu0 %v543
    %v1237 = vpop.f32.mrb[0].mxu0
    %v1238 = vadd.f32 %v1130, %v1237
    %v1239 = vpop.f32.mrb[0].mxu0
    %1240 = vmatprep.mubr.f32.mxu0 0.0
    %1241 = vmatmul.mubr.f32.gmra.mrb[0].mxu0 %v548
    %v1242 = vpop.f32.mrb[0].mxu0
    %v1243 = vadd.f32 %v1130, %v1242
    %v1244 = vpop.f32.mrb[0].mxu0
    %1245 = vmatprep.mubr.f32.mxu0 0.0
    %1246 = vmatmul.mubr.f32.gmra.mrb[0].mxu0 %v553
    %v1247 = vpop.f32.mrb[0].mxu0
    %v1248 = vadd.f32 %v1130, %v1247
    %v1249 = vpop.f32.mrb[0].mxu0
    %1250 = vmatprep.mubr.f32.mxu0 0.0
    %1251 = vmatmul.mubr.f32.gmra.mrb[0].mxu0 %v558
    %v1252 = vpop.f32.mrb[0].mxu0
    %v1253 = vadd.f32 %v1130, %v1252
    %v1254 = vpop.f32.mrb[0].mxu0
    %1255 = vmatprep.mubr.f32.mxu0 0.0
    %1256 = vmatmul.mubr.f32.gmra.mrb[0].mxu0 %v563
    %v1257 = vpop.f32.mrb[0].mxu0
    %v1258 = vadd.f32 %v1130, %v1257
    %v1259 = vpop.f32.mrb[0].mxu0
    %1260 = vmatprep.mubr.f32.mxu0 0.0
    %1261 = vmatmul.mubr.f32.gmra.mrb[0].mxu0 %v568
    %v1262 = vpop.f32.mrb[0].mxu0
    %v1263 = vadd.f32 %v1130, %v1262
    %v1264 = vpop.f32.mrb[0].mxu0
    %1265 = vmatprep.mubr.f32.mxu0 0.0
    %1266 = vmatmul.mubr.f32.gmra.mrb[0].mxu0 %v573
    %v1267 = vpop.f32.mrb[0].mxu0
    %v1268 = vadd.f32 %v1130, %v1267
    %v1269 = vpop.f32.mrb[0].mxu0
    %1270 = vmatprep.mubr.f32.mxu0 0.0
    %1271 = vmatmul.mubr.f32.gmra.mrb[0].mxu0 %v578
    %v1272 = vpop.f32.mrb[0].mxu0
    %v1273 = vadd.f32 %v1130, %v1272
    %v1274 = vpop.f32.mrb[0].mxu0
    %1275 = vdwg.mxu0
    %v1276 = vmax.f32 %v1198, 0.0
    %v1277 = vmax.f32 %v1203, 0.0
    %v1278 = vmax.f32 %v1208, 0.0
    %v1279 = vmax.f32 %v1213, 0.0
    %v1280 = vmax.f32 %v1218, 0.0
    %v1281 = vmax.f32 %v1223, 0.0
    %v1282 = vmax.f32 %v1228, 0.0
    %v1283 = vmax.f32 %v1233, 0.0
    %v1284 = vmax.f32 %v1238, 0.0
    %v1285 = vmax.f32 %v1243, 0.0
    %v1286 = vmax.f32 %v1248, 0.0
    %v1287 = vmax.f32 %v1253, 0.0
    %v1288 = vmax.f32 %v1258, 0.0
    %v1289 = vmax.f32 %v1263, 0.0
    %v1290 = vmax.f32 %v1268, 0.0
    %v1291 = vmax.f32 %v1273, 0.0
    %s1292 = scalar_lea.vmem [#allocation5], 896
    %v1293 = vld [vmem:[%s1292] sm:$0xff]
    %v1294 = vld [vmem:[%s1292 + $0x8] sm:$0xff]
    %v1295 = vld [vmem:[%s1292 + $0x10] sm:$0xff]
    %v1296 = vld [vmem:[%s1292 + $0x18] sm:$0xff]
    %v1297 = vld [vmem:[%s1292 + $0x20] sm:$0xff]
    %v1298 = vld [vmem:[%s1292 + $0x28] sm:$0xff]
    %v1299 = vld [vmem:[%s1292 + $0x30] sm:$0xff]
    %v1300 = vld [vmem:[%s1292 + $0x38] sm:$0xff]
    %v1301 = vld [vmem:[%s1292 + $0x40] sm:$0xff]
    %v1302 = vld [vmem:[%s1292 + $0x48] sm:$0xff]
    %v1303 = vld [vmem:[%s1292 + $0x50] sm:$0xff]
    %v1304 = vld [vmem:[%s1292 + $0x58] sm:$0xff]
    %v1305 = vld [vmem:[%s1292 + $0x60] sm:$0xff]
    %v1306 = vld [vmem:[%s1292 + $0x68] sm:$0xff]
    %v1307 = vld [vmem:[%s1292 + $0x70] sm:$0xff]
    %v1308 = vld [vmem:[%s1292 + $0x78] sm:$0xff]
    %1309 = vmatprep.subr.mxu0 0.0
    %1310 = vmatpush1.msra.mxu0 %v1293
    %1311 = vmatprep.subr.mxu0 0.0
    %1312 = vmatpush1.msra.mxu0 %v1294
    %1313 = vmatprep.subr.mxu0 0.0
    %1314 = vmatpush1.msra.mxu0 %v1295
    %1315 = vmatprep.subr.mxu0 0.0
    %1316 = vmatpush1.msra.mxu0 %v1296
    %1317 = vmatprep.subr.mxu0 0.0
    %1318 = vmatpush1.msra.mxu0 %v1297
    %1319 = vmatprep.subr.mxu0 0.0
    %1320 = vmatpush1.msra.mxu0 %v1298
    %1321 = vmatprep.subr.mxu0 0.0
    %1322 = vmatpush1.msra.mxu0 %v1299
    %1323 = vmatprep.subr.mxu0 0.0
    %1324 = vmatpush1.msra.mxu0 %v1300
    %1325 = vmatprep.subr.mxu0 0.0
    %1326 = vmatpush1.msra.mxu0 %v1301
    %1327 = vmatprep.subr.mxu0 0.0
    %1328 = vmatpush1.msra.mxu0 %v1302
    %1329 = vmatprep.subr.mxu0 0.0
    %1330 = vmatpush1.msra.mxu0 %v1303
    %1331 = vmatprep.subr.mxu0 0.0
    %1332 = vmatpush1.msra.mxu0 %v1304
    %1333 = vmatprep.subr.mxu0 0.0
    %1334 = vmatpush1.msra.mxu0 %v1305
    %1335 = vmatprep.subr.mxu0 0.0
    %1336 = vmatpush1.msra.mxu0 %v1306
    %1337 = vmatprep.subr.mxu0 0.0
    %1338 = vmatpush1.msra.mxu0 %v1307
    %1339 = vmatprep.subr.mxu0 0.0
    %1340 = vmatpush1.msra.mxu0 %v1308
    %1341 = vmatprep.subr.mxu0 0.0
    %1342 = vmatpush1.msra.mxu0 0.0
    %1343 = vmatprep.subr.mxu0 0.0
    %1344 = vmatpush1.msra.mxu0 0.0
    %1345 = vmatprep.subr.mxu0 0.0
    %1346 = vmatpush1.msra.mxu0 0.0
    %1347 = vmatprep.subr.mxu0 0.0
    %1348 = vmatpush1.msra.mxu0 0.0
    %1349 = vmatprep.subr.mxu0 0.0
    %1350 = vmatpush1.msra.mxu0 0.0
    %1351 = vmatprep.subr.mxu0 0.0
    %1352 = vmatpush1.msra.mxu0 0.0
    %1353 = vmatprep.subr.mxu0 0.0
    %1354 = vmatpush1.msra.mxu0 0.0
    %1355 = vmatprep.subr.mxu0 0.0
    %1356 = vmatpush1.msra.mxu0 0.0
    %1357 = vmatprep.subr.mxu0 0.0
    %1358 = vmatpush1.msra.mxu0 0.0
    %1359 = vmatprep.subr.mxu0 0.0
    %1360 = vmatpush1.msra.mxu0 0.0
    %1361 = vmatprep.subr.mxu0 0.0
    %1362 = vmatpush1.msra.mxu0 0.0
    %1363 = vmatprep.subr.mxu0 0.0
    %1364 = vmatpush1.msra.mxu0 0.0
    %1365 = vmatprep.subr.mxu0 0.0
    %1366 = vmatpush1.msra.mxu0 0.0
    %1367 = vmatprep.subr.mxu0 0.0
    %1368 = vmatpush1.msra.mxu0 0.0
    %1369 = vmatprep.subr.mxu0 0.0
    %1370 = vmatpush1.msra.mxu0 0.0
    %1371 = vmatprep.subr.mxu0 0.0
    %1372 = vmatpush1.msra.mxu0 0.0
    %1373 = vmatprep.mubr.f32.mxu0 0.0
    %1374 = vmatmul.mubr.f32.gmra.mrb[0].mxu0 %v54
    %v1375 = vpop.f32.mrb[0].mxu0
    %v1376 = vadd.f32 %v1130, %v1375
    %v1377 = vpop.f32.mrb[0].mxu0
    %1378 = vmatprep.mubr.f32.mxu0 0.0
    %1379 = vmatmul.mubr.f32.gmra.mrb[0].mxu0 %v55
    %v1380 = vpop.f32.mrb[0].mxu0
    %v1381 = vadd.f32 %v1130, %v1380
    %v1382 = vpop.f32.mrb[0].mxu0
    %1383 = vmatprep.mubr.f32.mxu0 0.0
    %1384 = vmatmul.mubr.f32.gmra.mrb[0].mxu0 %v56
    %v1385 = vpop.f32.mrb[0].mxu0
    %v1386 = vadd.f32 %v1130, %v1385
    %v1387 = vpop.f32.mrb[0].mxu0
    %1388 = vmatprep.mubr.f32.mxu0 0.0
    %1389 = vmatmul.mubr.f32.gmra.mrb[0].mxu0 %v57
    %v1390 = vpop.f32.mrb[0].mxu0
    %v1391 = vadd.f32 %v1130, %v1390
    %v1392 = vpop.f32.mrb[0].mxu0
    %1393 = vmatprep.mubr.f32.mxu0 0.0
    %1394 = vmatmul.mubr.f32.gmra.mrb[0].mxu0 %v58
    %v1395 = vpop.f32.mrb[0].mxu0
    %v1396 = vadd.f32 %v1130, %v1395
    %v1397 = vpop.f32.mrb[0].mxu0
    %1398 = vmatprep.mubr.f32.mxu0 0.0
    %1399 = vmatmul.mubr.f32.gmra.mrb[0].mxu0 %v59
    %v1400 = vpop.f32.mrb[0].mxu0
    %v1401 = vadd.f32 %v1130, %v1400
    %v1402 = vpop.f32.mrb[0].mxu0
    %1403 = vmatprep.mubr.f32.mxu0 0.0
    %1404 = vmatmul.mubr.f32.gmra.mrb[0].mxu0 %v60
    %v1405 = vpop.f32.mrb[0].mxu0
    %v1406 = vadd.f32 %v1130, %v1405
    %v1407 = vpop.f32.mrb[0].mxu0
    %1408 = vmatprep.mubr.f32.mxu0 0.0
    %1409 = vmatmul.mubr.f32.gmra.mrb[0].mxu0 %v61
    %v1410 = vpop.f32.mrb[0].mxu0
    %v1411 = vadd.f32 %v1130, %v1410
    %v1412 = vpop.f32.mrb[0].mxu0
    %1413 = vmatprep.mubr.f32.mxu0 0.0
    %1414 = vmatmul.mubr.f32.gmra.mrb[0].mxu0 %v62
    %v1415 = vpop.f32.mrb[0].mxu0
    %v1416 = vadd.f32 %v1130, %v1415
    %v1417 = vpop.f32.mrb[0].mxu0
    %1418 = vmatprep.mubr.f32.mxu0 0.0
    %1419 = vmatmul.mubr.f32.gmra.mrb[0].mxu0 %v63
    %v1420 = vpop.f32.mrb[0].mxu0
    %v1421 = vadd.f32 %v1130, %v1420
    %v1422 = vpop.f32.mrb[0].mxu0
    %1423 = vmatprep.mubr.f32.mxu0 0.0
    %1424 = vmatmul.mubr.f32.gmra.mrb[0].mxu0 %v64
    %v1425 = vpop.f32.mrb[0].mxu0
    %v1426 = vadd.f32 %v1130, %v1425
    %v1427 = vpop.f32.mrb[0].mxu0
    %1428 = vmatprep.mubr.f32.mxu0 0.0
    %1429 = vmatmul.mubr.f32.gmra.mrb[0].mxu0 %v65
    %v1430 = vpop.f32.mrb[0].mxu0
    %v1431 = vadd.f32 %v1130, %v1430
    %v1432 = vpop.f32.mrb[0].mxu0
    %1433 = vmatprep.mubr.f32.mxu0 0.0
    %1434 = vmatmul.mubr.f32.gmra.mrb[0].mxu0 %v66
    %v1435 = vpop.f32.mrb[0].mxu0
    %v1436 = vadd.f32 %v1130, %v1435
    %v1437 = vpop.f32.mrb[0].mxu0
    %1438 = vmatprep.mubr.f32.mxu0 0.0
    %1439 = vmatmul.mubr.f32.gmra.mrb[0].mxu0 %v67
    %v1440 = vpop.f32.mrb[0].mxu0
    %v1441 = vadd.f32 %v1130, %v1440
    %v1442 = vpop.f32.mrb[0].mxu0
    %1443 = vmatprep.mubr.f32.mxu0 0.0
    %1444 = vmatmul.mubr.f32.gmra.mrb[0].mxu0 %v68
    %v1445 = vpop.f32.mrb[0].mxu0
    %v1446 = vadd.f32 %v1130, %v1445
    %v1447 = vpop.f32.mrb[0].mxu0
    %1448 = vmatprep.mubr.f32.mxu0 0.0
    %1449 = vmatmul.mubr.f32.gmra.mrb[0].mxu0 %v69
    %v1450 = vpop.f32.mrb[0].mxu0
    %v1451 = vadd.f32 %v1130, %v1450
    %v1452 = vpop.f32.mrb[0].mxu0
    %1453 = vdwg.mxu0
    %v1454 = vmax.f32 %v1376, 0.0
    %v1455 = vmax.f32 %v1381, 0.0
    %v1456 = vmax.f32 %v1386, 0.0
    %v1457 = vmax.f32 %v1391, 0.0
    %v1458 = vmax.f32 %v1396, 0.0
    %v1459 = vmax.f32 %v1401, 0.0
    %v1460 = vmax.f32 %v1406, 0.0
    %v1461 = vmax.f32 %v1411, 0.0
    %v1462 = vmax.f32 %v1416, 0.0
    %v1463 = vmax.f32 %v1421, 0.0
    %v1464 = vmax.f32 %v1426, 0.0
    %v1465 = vmax.f32 %v1431, 0.0
    %v1466 = vmax.f32 %v1436, 0.0
    %v1467 = vmax.f32 %v1441, 0.0
    %v1468 = vmax.f32 %v1446, 0.0
    %v1469 = vmax.f32 %v1451, 0.0
    %s1470 = scalar_lea.vmem [#allocation5], 1024
    %v1471 = vld [vmem:[%s1470] sm:$0xff]
    %v1472 = vld [vmem:[%s1470 + $0x8] sm:$0xff]
    %v1473 = vld [vmem:[%s1470 + $0x10] sm:$0xff]
    %v1474 = vld [vmem:[%s1470 + $0x18] sm:$0xff]
    %v1475 = vld [vmem:[%s1470 + $0x20] sm:$0xff]
    %v1476 = vld [vmem:[%s1470 + $0x28] sm:$0xff]
    %v1477 = vld [vmem:[%s1470 + $0x30] sm:$0xff]
    %v1478 = vld [vmem:[%s1470 + $0x38] sm:$0xff]
    %v1479 = vld [vmem:[%s1470 + $0x40] sm:$0xff]
    %v1480 = vld [vmem:[%s1470 + $0x48] sm:$0xff]
    %v1481 = vld [vmem:[%s1470 + $0x50] sm:$0xff]
    %v1482 = vld [vmem:[%s1470 + $0x58] sm:$0xff]
    %v1483 = vld [vmem:[%s1470 + $0x60] sm:$0xff]
    %v1484 = vld [vmem:[%s1470 + $0x68] sm:$0xff]
    %v1485 = vld [vmem:[%s1470 + $0x70] sm:$0xff]
    %v1486 = vld [vmem:[%s1470 + $0x78] sm:$0xff]
    %v1487 = vld [vmem:[#allocation7 + $0x5] sm:$0x1]
    %v1488 = vlaneseq
    %v1489 = vshrl.u32 %v1488, 7
    %v1490 = vsub.s32 0, %v1489
    %v1491 = vrot.slane %v1487, %v1490
    %1492 = vmatprep.subr.mxu0 0.0
    %1493 = vmatpush1.msra.mxu0 %v1471
    %1494 = vmatprep.subr.mxu0 0.0
    %1495 = vmatpush1.msra.mxu0 %v1472
    %1496 = vmatprep.subr.mxu0 0.0
    %1497 = vmatpush1.msra.mxu0 %v1473
    %1498 = vmatprep.subr.mxu0 0.0
    %1499 = vmatpush1.msra.mxu0 %v1474
    %1500 = vmatprep.subr.mxu0 0.0
    %1501 = vmatpush1.msra.mxu0 %v1475
    %1502 = vmatprep.subr.mxu0 0.0
    %1503 = vmatpush1.msra.mxu0 %v1476
    %1504 = vmatprep.subr.mxu0 0.0
    %1505 = vmatpush1.msra.mxu0 %v1477
    %1506 = vmatprep.subr.mxu0 0.0
    %1507 = vmatpush1.msra.mxu0 %v1478
    %1508 = vmatprep.subr.mxu0 0.0
    %1509 = vmatpush1.msra.mxu0 %v1479
    %1510 = vmatprep.subr.mxu0 0.0
    %1511 = vmatpush1.msra.mxu0 %v1480
    %1512 = vmatprep.subr.mxu0 0.0
    %1513 = vmatpush1.msra.mxu0 %v1481
    %1514 = vmatprep.subr.mxu0 0.0
    %1515 = vmatpush1.msra.mxu0 %v1482
    %1516 = vmatprep.subr.mxu0 0.0
    %1517 = vmatpush1.msra.mxu0 %v1483
    %1518 = vmatprep.subr.mxu0 0.0
    %1519 = vmatpush1.msra.mxu0 %v1484
    %1520 = vmatprep.subr.mxu0 0.0
    %1521 = vmatpush1.msra.mxu0 %v1485
    %1522 = vmatprep.subr.mxu0 0.0
    %1523 = vmatpush1.msra.mxu0 %v1486
    %1524 = vmatprep.subr.mxu0 0.0
    %1525 = vmatpush1.msra.mxu0 0.0
    %1526 = vmatprep.subr.mxu0 0.0
    %1527 = vmatpush1.msra.mxu0 0.0
    %1528 = vmatprep.subr.mxu0 0.0
    %1529 = vmatpush1.msra.mxu0 0.0
    %1530 = vmatprep.subr.mxu0 0.0
    %1531 = vmatpush1.msra.mxu0 0.0
    %1532 = vmatprep.subr.mxu0 0.0
    %1533 = vmatpush1.msra.mxu0 0.0
    %1534 = vmatprep.subr.mxu0 0.0
    %1535 = vmatpush1.msra.mxu0 0.0
    %1536 = vmatprep.subr.mxu0 0.0
    %1537 = vmatpush1.msra.mxu0 0.0
    %1538 = vmatprep.subr.mxu0 0.0
    %1539 = vmatpush1.msra.mxu0 0.0
    %1540 = vmatprep.subr.mxu0 0.0
    %1541 = vmatpush1.msra.mxu0 0.0
    %1542 = vmatprep.subr.mxu0 0.0
    %1543 = vmatpush1.msra.mxu0 0.0
    %1544 = vmatprep.subr.mxu0 0.0
    %1545 = vmatpush1.msra.mxu0 0.0
    %1546 = vmatprep.subr.mxu0 0.0
    %1547 = vmatpush1.msra.mxu0 0.0
    %1548 = vmatprep.subr.mxu0 0.0
    %1549 = vmatpush1.msra.mxu0 0.0
    %1550 = vmatprep.subr.mxu0 0.0
    %1551 = vmatpush1.msra.mxu0 0.0
    %1552 = vmatprep.subr.mxu0 0.0
    %1553 = vmatpush1.msra.mxu0 0.0
    %1554 = vmatprep.subr.mxu0 0.0
    %1555 = vmatpush1.msra.mxu0 0.0
    %1556 = vmatprep.mubr.f32.mxu0 0.0
    %1557 = vmatmul.mubr.f32.gmra.mrb[0].mxu0 %v1276
    %v1558 = vpop.f32.mrb[0].mxu0
    %v1559 = vadd.f32 %v1491, %v1558
    %v1560 = vpop.f32.mrb[0].mxu0
    %1561 = vmatprep.mubr.f32.mxu0 0.0
    %1562 = vmatmul.mubr.f32.gmra.mrb[0].mxu0 %v1277
    %v1563 = vpop.f32.mrb[0].mxu0
    %v1564 = vadd.f32 %v1491, %v1563
    %v1565 = vpop.f32.mrb[0].mxu0
    %1566 = vmatprep.mubr.f32.mxu0 0.0
    %1567 = vmatmul.mubr.f32.gmra.mrb[0].mxu0 %v1278
    %v1568 = vpop.f32.mrb[0].mxu0
    %v1569 = vadd.f32 %v1491, %v1568
    %v1570 = vpop.f32.mrb[0].mxu0
    %1571 = vmatprep.mubr.f32.mxu0 0.0
    %1572 = vmatmul.mubr.f32.gmra.mrb[0].mxu0 %v1279
    %v1573 = vpop.f32.mrb[0].mxu0
    %v1574 = vadd.f32 %v1491, %v1573
    %v1575 = vpop.f32.mrb[0].mxu0
    %1576 = vmatprep.mubr.f32.mxu0 0.0
    %1577 = vmatmul.mubr.f32.gmra.mrb[0].mxu0 %v1280
    %v1578 = vpop.f32.mrb[0].mxu0
    %v1579 = vadd.f32 %v1491, %v1578
    %v1580 = vpop.f32.mrb[0].mxu0
    %1581 = vmatprep.mubr.f32.mxu0 0.0
    %1582 = vmatmul.mubr.f32.gmra.mrb[0].mxu0 %v1281
    %v1583 = vpop.f32.mrb[0].mxu0
    %v1584 = vadd.f32 %v1491, %v1583
    %v1585 = vpop.f32.mrb[0].mxu0
    %1586 = vmatprep.mubr.f32.mxu0 0.0
    %1587 = vmatmul.mubr.f32.gmra.mrb[0].mxu0 %v1282
    %v1588 = vpop.f32.mrb[0].mxu0
    %v1589 = vadd.f32 %v1491, %v1588
    %v1590 = vpop.f32.mrb[0].mxu0
    %1591 = vmatprep.mubr.f32.mxu0 0.0
    %1592 = vmatmul.mubr.f32.gmra.mrb[0].mxu0 %v1283
    %v1593 = vpop.f32.mrb[0].mxu0
    %v1594 = vadd.f32 %v1491, %v1593
    %v1595 = vpop.f32.mrb[0].mxu0
    %1596 = vmatprep.mubr.f32.mxu0 0.0
    %1597 = vmatmul.mubr.f32.gmra.mrb[0].mxu0 %v1284
    %v1598 = vpop.f32.mrb[0].mxu0
    %v1599 = vadd.f32 %v1491, %v1598
    %v1600 = vpop.f32.mrb[0].mxu0
    %1601 = vmatprep.mubr.f32.mxu0 0.0
    %1602 = vmatmul.mubr.f32.gmra.mrb[0].mxu0 %v1285
    %v1603 = vpop.f32.mrb[0].mxu0
    %v1604 = vadd.f32 %v1491, %v1603
    %v1605 = vpop.f32.mrb[0].mxu0
    %1606 = vmatprep.mubr.f32.mxu0 0.0
    %1607 = vmatmul.mubr.f32.gmra.mrb[0].mxu0 %v1286
    %v1608 = vpop.f32.mrb[0].mxu0
    %v1609 = vadd.f32 %v1491, %v1608
    %v1610 = vpop.f32.mrb[0].mxu0
    %1611 = vmatprep.mubr.f32.mxu0 0.0
    %1612 = vmatmul.mubr.f32.gmra.mrb[0].mxu0 %v1287
    %v1613 = vpop.f32.mrb[0].mxu0
    %v1614 = vadd.f32 %v1491, %v1613
    %v1615 = vpop.f32.mrb[0].mxu0
    %1616 = vmatprep.mubr.f32.mxu0 0.0
    %1617 = vmatmul.mubr.f32.gmra.mrb[0].mxu0 %v1288
    %v1618 = vpop.f32.mrb[0].mxu0
    %v1619 = vadd.f32 %v1491, %v1618
    %v1620 = vpop.f32.mrb[0].mxu0
    %1621 = vmatprep.mubr.f32.mxu0 0.0
    %1622 = vmatmul.mubr.f32.gmra.mrb[0].mxu0 %v1289
    %v1623 = vpop.f32.mrb[0].mxu0
    %v1624 = vadd.f32 %v1491, %v1623
    %v1625 = vpop.f32.mrb[0].mxu0
    %1626 = vmatprep.mubr.f32.mxu0 0.0
    %1627 = vmatmul.mubr.f32.gmra.mrb[0].mxu0 %v1290
    %v1628 = vpop.f32.mrb[0].mxu0
    %v1629 = vadd.f32 %v1491, %v1628
    %v1630 = vpop.f32.mrb[0].mxu0
    %1631 = vmatprep.mubr.f32.mxu0 0.0
    %1632 = vmatmul.mubr.f32.gmra.mrb[0].mxu0 %v1291
    %v1633 = vpop.f32.mrb[0].mxu0
    %v1634 = vadd.f32 %v1491, %v1633
    %v1635 = vpop.f32.mrb[0].mxu0
    %1636 = vdwg.mxu0
    %s1637 = scalar_lea.vmem [#allocation5], 1152
    %v1638 = vld [vmem:[%s1637] sm:$0xff]
    %v1639 = vld [vmem:[%s1637 + $0x8] sm:$0xff]
    %v1640 = vld [vmem:[%s1637 + $0x10] sm:$0xff]
    %v1641 = vld [vmem:[%s1637 + $0x18] sm:$0xff]
    %v1642 = vld [vmem:[%s1637 + $0x20] sm:$0xff]
    %v1643 = vld [vmem:[%s1637 + $0x28] sm:$0xff]
    %v1644 = vld [vmem:[%s1637 + $0x30] sm:$0xff]
    %v1645 = vld [vmem:[%s1637 + $0x38] sm:$0xff]
    %v1646 = vld [vmem:[%s1637 + $0x40] sm:$0xff]
    %v1647 = vld [vmem:[%s1637 + $0x48] sm:$0xff]
    %v1648 = vld [vmem:[%s1637 + $0x50] sm:$0xff]
    %v1649 = vld [vmem:[%s1637 + $0x58] sm:$0xff]
    %v1650 = vld [vmem:[%s1637 + $0x60] sm:$0xff]
    %v1651 = vld [vmem:[%s1637 + $0x68] sm:$0xff]
    %v1652 = vld [vmem:[%s1637 + $0x70] sm:$0xff]
    %v1653 = vld [vmem:[%s1637 + $0x78] sm:$0xff]
    %v1654 = vld [vmem:[#allocation7 + $0x6] sm:$0x1]
    %v1655 = vlaneseq
    %v1656 = vshrl.u32 %v1655, 7
    %v1657 = vsub.s32 0, %v1656
    %v1658 = vrot.slane %v1654, %v1657
    %1659 = vmatprep.subr.mxu0 0.0
    %1660 = vmatpush1.msra.mxu0 %v1638
    %1661 = vmatprep.subr.mxu0 0.0
    %1662 = vmatpush1.msra.mxu0 %v1639
    %1663 = vmatprep.subr.mxu0 0.0
    %1664 = vmatpush1.msra.mxu0 %v1640
    %1665 = vmatprep.subr.mxu0 0.0
    %1666 = vmatpush1.msra.mxu0 %v1641
    %1667 = vmatprep.subr.mxu0 0.0
    %1668 = vmatpush1.msra.mxu0 %v1642
    %1669 = vmatprep.subr.mxu0 0.0
    %1670 = vmatpush1.msra.mxu0 %v1643
    %1671 = vmatprep.subr.mxu0 0.0
    %1672 = vmatpush1.msra.mxu0 %v1644
    %1673 = vmatprep.subr.mxu0 0.0
    %1674 = vmatpush1.msra.mxu0 %v1645
    %1675 = vmatprep.subr.mxu0 0.0
    %1676 = vmatpush1.msra.mxu0 %v1646
    %1677 = vmatprep.subr.mxu0 0.0
    %1678 = vmatpush1.msra.mxu0 %v1647
    %1679 = vmatprep.subr.mxu0 0.0
    %1680 = vmatpush1.msra.mxu0 %v1648
    %1681 = vmatprep.subr.mxu0 0.0
    %1682 = vmatpush1.msra.mxu0 %v1649
    %1683 = vmatprep.subr.mxu0 0.0
    %1684 = vmatpush1.msra.mxu0 %v1650
    %1685 = vmatprep.subr.mxu0 0.0
    %1686 = vmatpush1.msra.mxu0 %v1651
    %1687 = vmatprep.subr.mxu0 0.0
    %1688 = vmatpush1.msra.mxu0 %v1652
    %1689 = vmatprep.subr.mxu0 0.0
    %1690 = vmatpush1.msra.mxu0 %v1653
    %1691 = vmatprep.subr.mxu0 0.0
    %1692 = vmatpush1.msra.mxu0 0.0
    %1693 = vmatprep.subr.mxu0 0.0
    %1694 = vmatpush1.msra.mxu0 0.0
    %1695 = vmatprep.subr.mxu0 0.0
    %1696 = vmatpush1.msra.mxu0 0.0
    %1697 = vmatprep.subr.mxu0 0.0
    %1698 = vmatpush1.msra.mxu0 0.0
    %1699 = vmatprep.subr.mxu0 0.0
    %1700 = vmatpush1.msra.mxu0 0.0
    %1701 = vmatprep.subr.mxu0 0.0
    %1702 = vmatpush1.msra.mxu0 0.0
    %1703 = vmatprep.subr.mxu0 0.0
    %1704 = vmatpush1.msra.mxu0 0.0
    %1705 = vmatprep.subr.mxu0 0.0
    %1706 = vmatpush1.msra.mxu0 0.0
    %1707 = vmatprep.subr.mxu0 0.0
    %1708 = vmatpush1.msra.mxu0 0.0
    %1709 = vmatprep.subr.mxu0 0.0
    %1710 = vmatpush1.msra.mxu0 0.0
    %1711 = vmatprep.subr.mxu0 0.0
    %1712 = vmatpush1.msra.mxu0 0.0
    %1713 = vmatprep.subr.mxu0 0.0
    %1714 = vmatpush1.msra.mxu0 0.0
    %1715 = vmatprep.subr.mxu0 0.0
    %1716 = vmatpush1.msra.mxu0 0.0
    %1717 = vmatprep.subr.mxu0 0.0
    %1718 = vmatpush1.msra.mxu0 0.0
    %1719 = vmatprep.subr.mxu0 0.0
    %1720 = vmatpush1.msra.mxu0 0.0
    %1721 = vmatprep.subr.mxu0 0.0
    %1722 = vmatpush1.msra.mxu0 0.0
    %1723 = vmatprep.mubr.f32.mxu0 0.0
    %1724 = vmatmul.mubr.f32.gmra.mrb[0].mxu0 %v1454
    %v1725 = vpop.f32.mrb[0].mxu0
    %v1726 = vadd.f32 %v1658, %v1725
    %v1727 = vpop.f32.mrb[0].mxu0
    %1728 = vmatprep.mubr.f32.mxu0 0.0
    %1729 = vmatmul.mubr.f32.gmra.mrb[0].mxu0 %v1455
    %v1730 = vpop.f32.mrb[0].mxu0
    %v1731 = vadd.f32 %v1658, %v1730
    %v1732 = vpop.f32.mrb[0].mxu0
    %1733 = vmatprep.mubr.f32.mxu0 0.0
    %1734 = vmatmul.mubr.f32.gmra.mrb[0].mxu0 %v1456
    %v1735 = vpop.f32.mrb[0].mxu0
    %v1736 = vadd.f32 %v1658, %v1735
    %v1737 = vpop.f32.mrb[0].mxu0
    %1738 = vmatprep.mubr.f32.mxu0 0.0
    %1739 = vmatmul.mubr.f32.gmra.mrb[0].mxu0 %v1457
    %v1740 = vpop.f32.mrb[0].mxu0
    %v1741 = vadd.f32 %v1658, %v1740
    %v1742 = vpop.f32.mrb[0].mxu0
    %1743 = vmatprep.mubr.f32.mxu0 0.0
    %1744 = vmatmul.mubr.f32.gmra.mrb[0].mxu0 %v1458
    %v1745 = vpop.f32.mrb[0].mxu0
    %v1746 = vadd.f32 %v1658, %v1745
    %v1747 = vpop.f32.mrb[0].mxu0
    %1748 = vmatprep.mubr.f32.mxu0 0.0
    %1749 = vmatmul.mubr.f32.gmra.mrb[0].mxu0 %v1459
    %v1750 = vpop.f32.mrb[0].mxu0
    %v1751 = vadd.f32 %v1658, %v1750
    %v1752 = vpop.f32.mrb[0].mxu0
    %1753 = vmatprep.mubr.f32.mxu0 0.0
    %1754 = vmatmul.mubr.f32.gmra.mrb[0].mxu0 %v1460
    %v1755 = vpop.f32.mrb[0].mxu0
    %v1756 = vadd.f32 %v1658, %v1755
    %v1757 = vpop.f32.mrb[0].mxu0
    %1758 = vmatprep.mubr.f32.mxu0 0.0
    %1759 = vmatmul.mubr.f32.gmra.mrb[0].mxu0 %v1461
    %v1760 = vpop.f32.mrb[0].mxu0
    %v1761 = vadd.f32 %v1658, %v1760
    %v1762 = vpop.f32.mrb[0].mxu0
    %1763 = vmatprep.mubr.f32.mxu0 0.0
    %1764 = vmatmul.mubr.f32.gmra.mrb[0].mxu0 %v1462
    %v1765 = vpop.f32.mrb[0].mxu0
    %v1766 = vadd.f32 %v1658, %v1765
    %v1767 = vpop.f32.mrb[0].mxu0
    %1768 = vmatprep.mubr.f32.mxu0 0.0
    %1769 = vmatmul.mubr.f32.gmra.mrb[0].mxu0 %v1463
    %v1770 = vpop.f32.mrb[0].mxu0
    %v1771 = vadd.f32 %v1658, %v1770
    %v1772 = vpop.f32.mrb[0].mxu0
    %1773 = vmatprep.mubr.f32.mxu0 0.0
    %1774 = vmatmul.mubr.f32.gmra.mrb[0].mxu0 %v1464
    %v1775 = vpop.f32.mrb[0].mxu0
    %v1776 = vadd.f32 %v1658, %v1775
    %v1777 = vpop.f32.mrb[0].mxu0
    %1778 = vmatprep.mubr.f32.mxu0 0.0
    %1779 = vmatmul.mubr.f32.gmra.mrb[0].mxu0 %v1465
    %v1780 = vpop.f32.mrb[0].mxu0
    %v1781 = vadd.f32 %v1658, %v1780
    %v1782 = vpop.f32.mrb[0].mxu0
    %1783 = vmatprep.mubr.f32.mxu0 0.0
    %1784 = vmatmul.mubr.f32.gmra.mrb[0].mxu0 %v1466
    %v1785 = vpop.f32.mrb[0].mxu0
    %v1786 = vadd.f32 %v1658, %v1785
    %v1787 = vpop.f32.mrb[0].mxu0
    %1788 = vmatprep.mubr.f32.mxu0 0.0
    %1789 = vmatmul.mubr.f32.gmra.mrb[0].mxu0 %v1467
    %v1790 = vpop.f32.mrb[0].mxu0
    %v1791 = vadd.f32 %v1658, %v1790
    %v1792 = vpop.f32.mrb[0].mxu0
    %1793 = vmatprep.mubr.f32.mxu0 0.0
    %1794 = vmatmul.mubr.f32.gmra.mrb[0].mxu0 %v1468
    %v1795 = vpop.f32.mrb[0].mxu0
    %v1796 = vadd.f32 %v1658, %v1795
    %v1797 = vpop.f32.mrb[0].mxu0
    %1798 = vmatprep.mubr.f32.mxu0 0.0
    %1799 = vmatmul.mubr.f32.gmra.mrb[0].mxu0 %v1469
    %v1800 = vpop.f32.mrb[0].mxu0
    %v1801 = vadd.f32 %v1658, %v1800
    %v1802 = vpop.f32.mrb[0].mxu0
    %1803 = vdwg.mxu0
    %v1804 = vadd.f32 %v1031, %v1559
    %v1805 = vadd.f32 %v1036, %v1564
    %v1806 = vadd.f32 %v1041, %v1569
    %v1807 = vadd.f32 %v1046, %v1574
    %v1808 = vadd.f32 %v1051, %v1579
    %v1809 = vadd.f32 %v1056, %v1584
    %v1810 = vadd.f32 %v1061, %v1589
    %v1811 = vadd.f32 %v1066, %v1594
    %v1812 = vadd.f32 %v1071, %v1599
    %v1813 = vadd.f32 %v1076, %v1604
    %v1814 = vadd.f32 %v1081, %v1609
    %v1815 = vadd.f32 %v1086, %v1614
    %v1816 = vadd.f32 %v1091, %v1619
    %v1817 = vadd.f32 %v1096, %v1624
    %v1818 = vadd.f32 %v1101, %v1629
    %v1819 = vadd.f32 %v1106, %v1634
    %v1820 = vadd.f32 %v1804, %v1726
    %v1821 = vadd.f32 %v1805, %v1731
    %v1822 = vadd.f32 %v1806, %v1736
    %v1823 = vadd.f32 %v1807, %v1741
    %v1824 = vadd.f32 %v1808, %v1746
    %v1825 = vadd.f32 %v1809, %v1751
    %v1826 = vadd.f32 %v1810, %v1756
    %v1827 = vadd.f32 %v1811, %v1761
    %v1828 = vadd.f32 %v1812, %v1766
    %v1829 = vadd.f32 %v1813, %v1771
    %v1830 = vadd.f32 %v1814, %v1776
    %v1831 = vadd.f32 %v1815, %v1781
    %v1832 = vadd.f32 %v1816, %v1786
    %v1833 = vadd.f32 %v1817, %v1791
    %v1834 = vadd.f32 %v1818, %v1796
    %v1835 = vadd.f32 %v1819, %v1801
    %1836 = vst [vmem:[#allocation8] sm:$0xff] %v1820
    %1837 = vst [vmem:[#allocation8 + $0x8] sm:$0xff] %v1821
    %1838 = vst [vmem:[#allocation8 + $0x10] sm:$0xff] %v1822
    %1839 = vst [vmem:[#allocation8 + $0x18] sm:$0xff] %v1823
    %1840 = vst [vmem:[#allocation8 + $0x20] sm:$0xff] %v1824
    %1841 = vst [vmem:[#allocation8 + $0x28] sm:$0xff] %v1825
    %1842 = vst [vmem:[#allocation8 + $0x30] sm:$0xff] %v1826
    %1843 = vst [vmem:[#allocation8 + $0x38] sm:$0xff] %v1827
    %1844 = vst [vmem:[#allocation8 + $0x40] sm:$0xff] %v1828
    %1845 = vst [vmem:[#allocation8 + $0x48] sm:$0xff] %v1829
    %1846 = vst [vmem:[#allocation8 + $0x50] sm:$0xff] %v1830
    %1847 = vst [vmem:[#allocation8 + $0x58] sm:$0xff] %v1831
    %1848 = vst [vmem:[#allocation8 + $0x60] sm:$0xff] %v1832
    %1849 = vst [vmem:[#allocation8 + $0x68] sm:$0xff] %v1833
    %1850 = vst [vmem:[#allocation8 + $0x70] sm:$0xff] %v1834
    %1851 = vst [vmem:[#allocation8 + $0x78] sm:$0xff] %v1835
    // Predicated region
    $region26: #{tpu_custom_call.1} parent=1 // pred_check
      _
    $region27: #{tpu_custom_call.1} parent=1 // pred_check_branch
      %1853 = sbr.rel (0) target = $region29
    $region28: #{tpu_custom_call.1} parent=1 // pred_region
      %s1855 = ssub.s32 2048, 2048
      %1856 = vsyncadd [#allocation4], %s1855
      %s1857 = sshll.u32 [#allocation8], 4
      %s1858 = int_to_ptr.vmem [resolvable:$true] %s1857
      %1863 = dma.vmem_to_hbm [thread:$0]  %s1858, 2048, %s3, [#allocation4], 128, 128, 8
    $region29: #{tpu_custom_call.1} parent=1 // pred_fallthru
      _
    // Predicated region
    $region30: #{tpu_custom_call.1} parent=1 // pred_check
      _
    $region31: #{tpu_custom_call.1} parent=1 // pred_check_branch
      %1865 = sbr.rel (0) target = $region33
    $region32: #{tpu_custom_call.1} parent=1 // pred_region
      %1866 = dma.done [#allocation4], 2048
    $region33: #{tpu_custom_call.1} parent=1 // pred_fallthru
      _
    %1867 = vsyncpa [#allocation3], 1
    %1868 = vsyncpa [#allocation6], 1
    %1869 = vsyncpa [#allocation4], 1

</llo_original>
